<compile_context>
chip_gen: v5e
topology: v5e:2x2
jax: 0.10.0
libtpu: 0.0.40
codegen_flags: <defaults>
</compile_context>

<pallas_src>
import math

import jax
import jax.numpy as jnp
from jax.experimental import pallas as pl
from jax.experimental.pallas import tpu as pltpu

MEM_LEN = 4
NUM_HEADS = 4
RECURRENT_STEPS = 1
_LN_EPS = 1e-5
_LANES = 128


def _round_up(x, m):
    return (x + m - 1) // m * m


# ----------------------------- in-kernel math helpers -----------------------------
def _mm(a, b):
    # a @ b   (weights are pre-transposed to (in, out) in the wrapper)
    return jax.lax.dot_general(a, b, (((1,), (0,)), ((), ())),
                               preferred_element_type=jnp.float32)


def _mm_t(a, b):
    # a @ b.T  (only used for the per-head score matmuls)
    return jax.lax.dot_general(a, b, (((1,), (1,)), ((), ())),
                               preferred_element_type=jnp.float32)


def _layer_norm(x, w, b):
    mu = jnp.mean(x, axis=-1, keepdims=True)
    var = jnp.mean(jnp.square(x - mu), axis=-1, keepdims=True)
    return (x - mu) * jax.lax.rsqrt(var + _LN_EPS) * w + b


def _sigmoid(x):
    return 1.0 / (1.0 + jnp.exp(-x))


def _maxpool_rows(x, mem_len):
    """init_mem(mem_init='max'): strided max-pool along rows (torch F.max_pool1d),
    as mem_len static window slice-maxes + one small row concat."""
    L, D = x.shape
    if L == mem_len:
        return x
    if L < mem_len:
        return jnp.concatenate([x, jnp.zeros((mem_len - L, D), x.dtype)], axis=0)
    stride = L // mem_len
    ksz = L - (mem_len - 1) * stride
    rows = [jnp.max(x[m * stride:m * stride + ksz, :], axis=0, keepdims=True)
            for m in range(mem_len)]
    return jnp.concatenate(rows, axis=0)


def _gated_attn(query, mem, slab_ref, *, tb, q_len, k_len, dq, dh, num_heads):
    """GatedMultiHeadAttn (pre_lnorm=True, key is value, mask=None, dropatt=0) on
    `tb` batch elements stacked along rows.  All projections are fused, wide
    matmuls against the pre-packed slab; cross-batch attention terms are zeroed
    with a block-diagonal mask applied to the (heads-)softmax weights."""
    hd = dh // num_heads
    r1 = _round_up(dq, 8)       # row offset of the k/v & output weight band
    rv = r1 + dh                # row holding all packed vectors (LN affine, biases)

    # pre_lnorm reassigns `query` to its LayerNorm; gate/residual use it too.
    qn = _layer_norm(query,
                     slab_ref[rv:rv + 1, 0:dq],
                     slab_ref[rv:rv + 1, dq:2 * dq])
    # key == value: one shared LN statistics pass; the k/v affine is folded into
    # the packed projection weights / bias.
    mu = jnp.mean(mem, axis=-1, keepdims=True)
    var = jnp.mean(jnp.square(mem - mu), axis=-1, keepdims=True)
    khat = (mem - mu) * jax.lax.rsqrt(var + _LN_EPS)

    # fused projections (2 matmuls instead of 4*num_heads + gate):
    qg = _mm(qn, slab_ref[0:dq, 0:dh + dq])                       # (tb*Q, dh+dq)
    kv = (_mm(khat, slab_ref[r1:r1 + dh, 0:2 * dh])
          + slab_ref[rv:rv + 1, 2 * dq:2 * dq + 2 * dh])          # (tb*K, 2*dh)
    hq, gate_q = qg[:, :dh], qg[:, dh:]
    hk, hv = kv[:, :dh], kv[:, dh:]

    # per-head scores; NOTE: the reference applies nn.Softmax(dim=-1) to the
    # (b, i, j, n) score tensor, i.e. the softmax normalizes over the *heads*
    # axis.  The 1/sqrt(head_dim) scale is folded into the q columns.
    scores = [_mm_t(hq[:, h * hd:(h + 1) * hd], hk[:, h * hd:(h + 1) * hd])
              for h in range(num_heads)]
    m = scores[0]
    for s in scores[1:]:
        m = jnp.maximum(m, s)
    es = [jnp.exp(s - m) for s in scores]
    z = es[0]
    for e in es[1:]:
        z = z + e
    zinv = 1.0 / z                              # one exact reciprocal for all heads
    if tb > 1:
        # block-diagonal mask: query row i only attends to key rows of its own
        # batch element (softmax is over heads, so masking after it is exact).
        qb = jax.lax.broadcasted_iota(jnp.int32, zinv.shape, 0) // q_len
        kb = jax.lax.broadcasted_iota(jnp.int32, zinv.shape, 1) // k_len
        zinv = jnp.where(qb == kb, zinv, 0.0)

    # weighted sums per head, concatenated at static lane offsets, then one
    # matmul against [o_net | Wgate_a @ o_net] (g_net bias folded into its bias).
    o = jnp.concatenate(
        [_mm(es[h] * zinv, hv[:, h * hd:(h + 1) * hd]) for h in range(num_heads)],
        axis=1)                                                   # (tb*Q, dh)
    og = (_mm(o, slab_ref[r1:r1 + dh, 2 * dh:2 * dh + 2 * dq])
          + slab_ref[rv:rv + 1, 2 * dq + 2 * dh:2 * dq + 2 * dh + 2 * dq])
    attn_out, gate_a = og[:, :dq], og[:, dq:]
    gate = _sigmoid(gate_q + gate_a)
    return gate * qn + (1.0 - gate) * attn_out


def _make_kernel(tb, P, Dp, G, Dg, Dh, num_heads):
    rb = _round_up(Dp + Dg, 8)          # bias row of the misc slab
    rows_out = _round_up(tb, 8)

    def kernel(pat_ref, gr_ref, lb_ref, pslab_ref, gslab_ref, mslab_ref, out_ref):
        # --- p_attn memory (max-pool + p_layer) and the pattern max-feature share
        #     one stacked matmul against Wp. ---
        pats = [pat_ref[b] for b in range(tb)]
        pool_rows = jnp.concatenate(
            [_maxpool_rows(p, MEM_LEN) for p in pats]
            + [jnp.max(p, axis=0, keepdims=True) for p in pats], axis=0)
        proj = (_mm(pool_rows, mslab_ref[0:Dp, Dh:2 * Dh])
                + mslab_ref[rb:rb + 1, Dh:2 * Dh])                # + bp
        mem_p = proj[:tb * MEM_LEN, :]                            # (tb*M, Dh)
        p_feat = proj[tb * MEM_LEN:, :]                           # (tb, Dh)

        # stacked graph features
        g = jnp.concatenate([gr_ref[b] for b in range(tb)], axis=0)   # (tb*G, Dg)
        for _ in range(RECURRENT_STEPS):
            g = _gated_attn(g, mem_p, pslab_ref, tb=tb, q_len=G, k_len=MEM_LEN,
                            dq=Dg, dh=Dh, num_heads=num_heads)
            pool_g = jnp.concatenate(
                [_maxpool_rows(g[b * G:(b + 1) * G, :], MEM_LEN)
                 for b in range(tb)], axis=0)
            mem_g = (_mm(pool_g, mslab_ref[Dp:Dp + Dg, Dh:2 * Dh])
                     + mslab_ref[rb:rb + 1, 2 * Dh:3 * Dh])       # + bg
            g = _gated_attn(g, mem_g, gslab_ref, tb=tb, q_len=G, k_len=MEM_LEN,
                            dq=Dg, dh=Dh, num_heads=num_heads)

        # --- prediction head (dropout = identity). g_layer is applied before the
        #     per-element max (project-then-max, as in the torch forward). ---
        gh = (_mm(g, mslab_ref[Dp:Dp + Dg, Dh:2 * Dh])
              + mslab_ref[rb:rb + 1, 2 * Dh:3 * Dh])              # (tb*G, Dh)
        g_feat = jnp.concatenate(
            [jnp.max(gh[b * G:(b + 1) * G, :], axis=0, keepdims=True)
             for b in range(tb)], axis=0)                         # (tb, Dh)

        # pred_layer1: (g-p) block folded into the packed p/g columns of W1; lens
        # columns + bias precomputed per batch element in the wrapper (lb).
        feat = jnp.concatenate([p_feat, g_feat, g_feat * p_feat], axis=1)
        lb = lb_ref[0:tb, :]
        y1 = jnp.maximum(_mm(feat, mslab_ref[0:3 * Dh, 0:Dh]) + lb[:, 0:Dh], 0.0)
        # pred_layer2: row-dot with the packed w2 row; lens columns + bias in lb.
        y2 = (jnp.sum(y1 * mslab_ref[rb:rb + 1, 3 * Dh:4 * Dh], axis=-1,
                      keepdims=True)
              + lb[:, Dh:Dh + 1])                                 # (tb, 1)

        # lane-dense (rows_out, 128) output tile; row b / lane 0 holds element b.
        if tb < rows_out:
            y2 = jnp.concatenate(
                [y2, jnp.zeros((rows_out - tb, 1), jnp.float32)], axis=0)
        out_ref[...] = jnp.broadcast_to(y2, (rows_out, _LANES))

    return kernel


# ------------------------------ wrapper-side prepack ------------------------------
def _pack_attn_slab(a, num_heads, dq, dh):
    """One lane-dense slab per GatedMultiHeadAttn: fused/transposed projections,
    LN affine + score scale + gate bias folded in."""
    dk = a['Wk'].shape[1]
    assert dk == dh, "mem_dim == hidden_dim in this module"
    hd = dh // num_heads
    scale = 1.0 / (hd ** 0.5)
    # [score-scaled q heads | gate(query) columns]            (dq, dh+dq)
    WqGT = jnp.concatenate([a['Wq'].T * scale, a['Wgate'][:, :dq].T], axis=1)
    # k/v LayerNorm affine folded into the (shared-stats) projections
    WkvT = jnp.concatenate([(a['Wk'] * a['k_ln_w']).T,
                            (a['Wv'] * a['v_ln_w']).T], axis=1)   # (dk, 2*dh)
    bkv = jnp.concatenate([a['k_ln_b'] @ a['Wk'].T,
                           a['v_ln_b'] @ a['Wv'].T], axis=1)      # (1, 2*dh)
    # [o_net | Wgate_attn @ o_net], gate bias folded into its bias half
    WoGT = jnp.concatenate([a['Wo'].T, (a['Wgate'][:, dq:] @ a['Wo']).T], axis=1)
    bog = jnp.concatenate([jnp.zeros((1, dq), jnp.float32), a['bgate']], axis=1)

    assert dh + dq <= _LANES and 2 * dh + 2 * dq <= _LANES
    assert 4 * dq + 2 * dh <= _LANES
    r1 = _round_up(dq, 8)
    rv = r1 + dh
    rows = _round_up(rv + 1, 8)
    slab = jnp.zeros((rows, _LANES), jnp.float32)
    slab = slab.at[0:dq, 0:dh + dq].set(WqGT)
    slab = slab.at[r1:r1 + dh, 0:2 * dh].set(WkvT)
    slab = slab.at[r1:r1 + dh, 2 * dh:2 * dh + 2 * dq].set(WoGT)
    slab = slab.at[rv, 0:dq].set(a['q_ln_w'][0])
    slab = slab.at[rv, dq:2 * dq].set(a['q_ln_b'][0])
    slab = slab.at[rv, 2 * dq:2 * dq + 2 * dh].set(bkv[0])
    slab = slab.at[rv, 2 * dq + 2 * dh:2 * dq + 2 * dh + 2 * dq].set(bog[0])
    return slab


def _pack_misc_slab(params, Dp, Dg, Dh):
    """Wp/Wg/W1/W2 + biases in one lane-dense slab.  The (g-p) feature block of
    pred_layer1 is folded into the p/g column blocks (exact)."""
    assert 4 * Dh <= _LANES
    W1 = params['W1']
    W1p, W1g = W1[:, 0:Dh], W1[:, Dh:2 * Dh]
    W1d, W1m = W1[:, 2 * Dh:3 * Dh], W1[:, 3 * Dh:4 * Dh]
    W1cT = jnp.concatenate([(W1p - W1d).T, (W1g + W1d).T, W1m.T], axis=0)
    rb = _round_up(Dp + Dg, 8)
    rows = _round_up(max(3 * Dh, rb + 1), 8)
    slab = jnp.zeros((rows, _LANES), jnp.float32)
    slab = slab.at[0:3 * Dh, 0:Dh].set(W1cT)
    slab = slab.at[0:Dp, Dh:2 * Dh].set(params['Wp'].T)
    slab = slab.at[Dp:Dp + Dg, Dh:2 * Dh].set(params['Wg'].T)
    slab = slab.at[rb, Dh:2 * Dh].set(params['bp'][0])
    slab = slab.at[rb, 2 * Dh:3 * Dh].set(params['bg'][0])
    slab = slab.at[rb, 3 * Dh:4 * Dh].set(params['W2'][0, :Dh])
    return slab


# --------------------------------- pallas wrapper -------------------------------
def max_mem_attn_predict_net(pattern, graph, pattern_len, graph_len, params,
                             batch_block=None):
    # TODO(synk): the attn_mask path (batch_convert_len_to_mask +
    # gather_indices_by_lens length-bucketed init_mem) performs data-dependent
    # batch regrouping and is not implemented; inputs are chosen so the torch
    # forward takes its mask=None path (max length < padded seq length).
    B, P, Dp = pattern.shape
    _, G, Dg = graph.shape
    Dh = params['Wp'].shape[0]
    assert Dh % NUM_HEADS == 0

    if batch_block is None:
        # keep >= 2 grid steps when possible so both v7x TensorCores get work;
        # on single-TC v5e / v6e pass batch_block=B to stack the whole batch.
        batch_block = B // 2 if (B >= 4 and B % 2 == 0) else 1
    tb = batch_block
    assert B % tb == 0
    nsteps = B // tb
    rows_out = _round_up(tb, 8)

    # lens features + precomputed lens contributions of pred_layer1/2 (+ biases)
    plf = pattern_len.astype(jnp.float32)
    glf = graph_len.astype(jnp.float32)
    lens = jnp.concatenate([plf, glf, 1.0 / plf, 1.0 / glf], axis=1)       # (B, 4)
    lb1 = lens @ params['W1'][:, 4 * Dh:].T + params['b1']                 # (B, Dh)
    lb2 = lens @ params['W2'][:, Dh:].T + params['b2']                     # (B, 1)
    lb = jnp.concatenate(
        [lb1, lb2, jnp.zeros((B, _LANES - Dh - 1), jnp.float32)], axis=1)  # (B, 128)
    lb = lb.reshape(nsteps, tb, _LANES)
    if tb < rows_out:
        lb = jnp.concatenate(
            [lb, jnp.zeros((nsteps, rows_out - tb, _LANES), jnp.float32)], axis=1)
    lb = lb.reshape(nsteps * rows_out, _LANES)

    p_slab = _pack_attn_slab(params['p_attn'], NUM_HEADS, Dg, Dh)
    g_slab = _pack_attn_slab(params['g_attn'], NUM_HEADS, Dg, Dh)
    m_slab = _pack_misc_slab(params, Dp, Dg, Dh)

    kernel = _make_kernel(tb, P, Dp, G, Dg, Dh, NUM_HEADS)
    out = pl.pallas_call(
        kernel,
        out_shape=jax.ShapeDtypeStruct((nsteps * rows_out, _LANES), jnp.float32),
        grid=(nsteps,),
        in_specs=[
            pl.BlockSpec((tb, P, Dp), lambda i: (i, 0, 0)),
            pl.BlockSpec((tb, G, Dg), lambda i: (i, 0, 0)),
            pl.BlockSpec((rows_out, _LANES), lambda i: (i, 0)),
            pl.BlockSpec(p_slab.shape, lambda i: (0, 0)),
            pl.BlockSpec(g_slab.shape, lambda i: (0, 0)),
            pl.BlockSpec(m_slab.shape, lambda i: (0, 0)),
        ],
        out_specs=pl.BlockSpec((rows_out, _LANES), lambda i: (i, 0)),
        compiler_params=pltpu.CompilerParams(
            dimension_semantics=("parallel",)),
    )(pattern, graph, lb, p_slab, g_slab, m_slab)

    return out.reshape(nsteps, rows_out, _LANES)[:, :tb, 0].reshape(B, 1)


# ------------------------------- parameter builder ------------------------------
def init_params(key, pattern_dim, graph_dim, hidden_dim, num_heads):
    keys = iter(jax.random.split(key, 48))

    def nrm(shape, std):
        return std * jax.random.normal(next(keys), shape, dtype=jnp.float32)

    head_dim = hidden_dim // num_heads
    attn_std = 1.0 / math.sqrt(head_dim)

    def attn_params(qdim, kdim, vdim, hdim):
        # torch inits LayerNorm to (1, 0); perturb slightly so the wrapper-side
        # LN-affine folding is actually exercised by the numerical check.
        return dict(
            q_ln_w=1.0 + nrm((1, qdim), 0.1), q_ln_b=nrm((1, qdim), 0.1),
            k_ln_w=1.0 + nrm((1, kdim), 0.1), k_ln_b=nrm((1, kdim), 0.1),
            v_ln_w=1.0 + nrm((1, vdim), 0.1), v_ln_b=nrm((1, vdim), 0.1),
            Wq=nrm((hdim, qdim), attn_std),
            Wk=nrm((hdim, kdim), attn_std),
            Wv=nrm((hdim, vdim), attn_std),
            Wo=nrm((qdim, hdim), attn_std),
            Wgate=nrm((qdim, 2 * qdim), attn_std),
            bgate=jnp.ones((1, qdim), jnp.float32),
        )

    lin_std = 1.0 / math.sqrt(hidden_dim)
    return dict(
        Wp=nrm((hidden_dim, pattern_dim), lin_std),
        bp=nrm((1, hidden_dim), 0.05),
        Wg=nrm((hidden_dim, graph_dim), lin_std),
        bg=nrm((1, hidden_dim), 0.05),
        p_attn=attn_params(graph_dim, hidden_dim, hidden_dim, hidden_dim),
        g_attn=attn_params(graph_dim, hidden_dim, hidden_dim, hidden_dim),
        W1=nrm((hidden_dim, 4 * hidden_dim + 4), lin_std),
        b1=jnp.zeros((1, hidden_dim), jnp.float32),
        # torch zero-inits pred_layer2 (output would be identically 0);
        # use small random values so the kernel output is non-trivial.
        W2=nrm((1, hidden_dim + 4), 0.05),
        b2=jnp.zeros((1, 1), jnp.float32),
    )


# ------------------------- pure-JAX reference (sanity check) ---------------------
def _ref_layer_norm(x, w, b):
    mu = jnp.mean(x, axis=-1, keepdims=True)
    var = jnp.mean(jnp.square(x - mu), axis=-1, keepdims=True)
    return (x - mu) * jax.lax.rsqrt(var + _LN_EPS) * w + b


def _ref_maxpool(x, mem_len):
    L = x.shape[0]
    if L == mem_len:
        return x
    if L < mem_len:
        return jnp.concatenate(
            [x, jnp.zeros((mem_len - L, x.shape[1]), x.dtype)], axis=0)
    stride = L // mem_len
    ksz = L - (mem_len - 1) * stride
    rows = [jnp.max(x[m * stride:m * stride + ksz, :], axis=0, keepdims=True)
            for m in range(mem_len)]
    return jnp.concatenate(rows, axis=0)


def _ref_gated_attn(query, key, value, a, num_heads):
    qn = _ref_layer_norm(query, a['q_ln_w'], a['q_ln_b'])
    kn = _ref_layer_norm(key, a['k_ln_w'], a['k_ln_b'])
    vn = _ref_layer_norm(value, a['v_ln_w'], a['v_ln_b'])
    Q, K = qn.shape[0], kn.shape[0]
    Dh = a['Wq'].shape[0]
    d = Dh // num_heads
    hq = (qn @ a['Wq'].T).reshape(Q, num_heads, d)
    hk = (kn @ a['Wk'].T).reshape(K, num_heads, d)
    hv = (vn @ a['Wv'].T).reshape(K, num_heads, d)
    s = jnp.einsum('ind,jnd->ijn', hq, hk) / (d ** 0.5)
    attn = jax.nn.softmax(s, axis=-1)        # softmax over the heads axis
    vec = jnp.einsum('ijn,jnd->ind', attn, hv).reshape(Q, Dh)
    attn_out = vec @ a['Wo'].T
    gate = jax.nn.sigmoid(
        jnp.concatenate([qn, attn_out], axis=1) @ a['Wgate'].T + a['bgate'])
    return gate * qn + (1.0 - gate) * attn_out


def _ref_forward(pattern, graph, pattern_len, graph_len, params):
    plf = pattern_len.astype(jnp.float32)
    glf = graph_len.astype(jnp.float32)
    lens = jnp.concatenate([plf, glf, 1.0 / plf, 1.0 / glf], axis=1)
    outs = []
    for b in range(pattern.shape[0]):
        pat, g = pattern[b], graph[b]
        mem_p = _ref_maxpool(pat, MEM_LEN) @ params['Wp'].T + params['bp']
        for _ in range(RECURRENT_STEPS):
            g = _ref_gated_attn(g, mem_p, mem_p, params['p_attn'], NUM_HEADS)
            mem_g = _ref_maxpool(g, MEM_LEN) @ params['Wg'].T + params['bg']
            g = _ref_gated_attn(g, mem_g, mem_g, params['g_attn'], NUM_HEADS)
        p_feat = jnp.max(pat, axis=0, keepdims=True) @ params['Wp'].T + params['bp']
        g_feat = jnp.max(g @ params['Wg'].T + params['bg'], axis=0, keepdims=True)
        feat = jnp.concatenate([p_feat, g_feat, g_feat - p_feat,
                                g_feat * p_feat, lens[b:b + 1]], axis=1)
        y = jnp.maximum(feat @ params['W1'].T + params['b1'], 0.0)
        y = jnp.concatenate([y, lens[b:b + 1]], axis=1) @ params['W2'].T + params['b2']
        outs.append(y)
    return jnp.concatenate(outs, axis=0)


# --------------------------------------- main -----------------------------------
if __name__ == "__main__":
    key = jax.random.PRNGKey(0)
    k1, k2, kp = jax.random.split(key, 3)

    B, P, G = 2, 8, 12
    pattern_dim, graph_dim, hidden_dim = 16, 8, 32

    pattern = jax.random.normal(k1, (B, P, pattern_dim), jnp.float32)
    graph = jax.random.normal(k2, (B, G, graph_dim), jnp.float32)
    # lengths chosen with max < padded seq_len so the torch forward's masks are None
    pattern_len = jnp.array([[7], [6]], jnp.int32)
    graph_len = jnp.array([[11], [9]], jnp.int32)

    params = init_params(kp, pattern_dim, graph_dim, hidden_dim, NUM_HEADS)

    # independent pure-JAX reference with the original (un-packed) weight layout
    ref = _ref_forward(pattern, graph, pattern_len, graph_len, params)

    # default: one element per grid step -> grid=(2,), both v7x cores get work
    out1 = jax.block_until_ready(
        max_mem_attn_predict_net(pattern, graph, pattern_len, graph_len, params))
    # fully batch-blocked variant (the single-TensorCore v5e / v6e configuration)
    out2 = jax.block_until_ready(
        max_mem_attn_predict_net(pattern, graph, pattern_len, graph_len, params,
                                 batch_block=B))

    assert out1.shape == (B, 1), out1.shape
    assert out2.shape == (B, 1), out2.shape
    assert bool(jnp.allclose(out1, ref, rtol=1e-3, atol=1e-3)), (out1, ref)
    assert bool(jnp.allclose(out2, ref, rtol=1e-3, atol=1e-3)), (out2, ref)
    print("KERNEL_OK")
</pallas_src>

<mosaic_0001>
module attributes {stable_mosaic.version = 11 : i64} {
  func.func @kernel(%arg0: i32, %arg1: memref<1x8x16xf32, #tpu.memory_space<vmem>>, %arg2: memref<1x12x8xf32, #tpu.memory_space<vmem>>, %arg3: memref<8x128xf32, #tpu.memory_space<vmem>>, %arg4: memref<48x128xf32, #tpu.memory_space<vmem>>, %arg5: memref<48x128xf32, #tpu.memory_space<vmem>>, %arg6: memref<96x128xf32, #tpu.memory_space<vmem>>, %arg7: memref<8x128xf32, #tpu.memory_space<vmem>>) attributes {dimension_semantics = [#tpu.dimension_semantics<parallel>], iteration_bounds = array<i64: 2>, scalar_prefetch = 0 : i64, scratch_operands = 0 : i64, tpu.core_type = #tpu.core_type<tc>, window_params = [{transform_indices = @transform_0, window_bounds = array<i64: 1, 8, 16>}, {transform_indices = @transform_1, window_bounds = array<i64: 1, 12, 8>}, {transform_indices = @transform_2, window_bounds = array<i64: 8, 128>}, {pipeline_mode = #tpu.pipeline_mode<synchronous>, transform_indices = @transform_3, window_bounds = array<i64: 48, 128>}, {pipeline_mode = #tpu.pipeline_mode<synchronous>, transform_indices = @transform_4, window_bounds = array<i64: 48, 128>}, {pipeline_mode = #tpu.pipeline_mode<synchronous>, transform_indices = @transform_5, window_bounds = array<i64: 96, 128>}, {transform_indices = @transform_6, window_bounds = array<i64: 8, 128>}]} {
    %c0 = arith.constant 0 : index
    %c0_0 = arith.constant 0 : index
    %c0_1 = arith.constant 0 : index
    %0 = vector.load %arg1[%c0, %c0_0, %c0_1] : memref<1x8x16xf32, #tpu.memory_space<vmem>>, vector<1x8x16xf32>
    %1 = vector.shape_cast %0 : vector<1x8x16xf32> to vector<8x16xf32>
    %2 = vector.extract_strided_slice %1 {offsets = [0, 0], sizes = [2, 16], strides = [1, 1]} : vector<8x16xf32> to vector<2x16xf32>
    %cst = arith.constant dense<0xFF800000> : vector<16xf32>
    %3 = vector.multi_reduction <maximumf>, %2, %cst [0] : vector<2x16xf32> to vector<16xf32>
    %4 = vector.shape_cast %3 : vector<16xf32> to vector<1x16xf32>
    %5 = vector.extract_strided_slice %1 {offsets = [2, 0], sizes = [2, 16], strides = [1, 1]} : vector<8x16xf32> to vector<2x16xf32>
    %cst_2 = arith.constant dense<0xFF800000> : vector<16xf32>
    %6 = vector.multi_reduction <maximumf>, %5, %cst_2 [0] : vector<2x16xf32> to vector<16xf32>
    %7 = vector.shape_cast %6 : vector<16xf32> to vector<1x16xf32>
    %8 = vector.extract_strided_slice %1 {offsets = [4, 0], sizes = [2, 16], strides = [1, 1]} : vector<8x16xf32> to vector<2x16xf32>
    %cst_3 = arith.constant dense<0xFF800000> : vector<16xf32>
    %9 = vector.multi_reduction <maximumf>, %8, %cst_3 [0] : vector<2x16xf32> to vector<16xf32>
    %10 = vector.shape_cast %9 : vector<16xf32> to vector<1x16xf32>
    %11 = vector.extract_strided_slice %1 {offsets = [6, 0], sizes = [2, 16], strides = [1, 1]} : vector<8x16xf32> to vector<2x16xf32>
    %cst_4 = arith.constant dense<0xFF800000> : vector<16xf32>
    %12 = vector.multi_reduction <maximumf>, %11, %cst_4 [0] : vector<2x16xf32> to vector<16xf32>
    %13 = vector.shape_cast %12 : vector<16xf32> to vector<1x16xf32>
    %14 = tpu.concatenate %4, %7, %10, %13 in 0 : vector<1x16xf32>, vector<1x16xf32>, vector<1x16xf32>, vector<1x16xf32> -> vector<4x16xf32>
    %cst_5 = arith.constant dense<0xFF800000> : vector<16xf32>
    %15 = vector.multi_reduction <maximumf>, %1, %cst_5 [0] : vector<8x16xf32> to vector<16xf32>
    %16 = vector.shape_cast %15 : vector<16xf32> to vector<1x16xf32>
    %17 = tpu.concatenate %14, %16 in 0 : vector<4x16xf32>, vector<1x16xf32> -> vector<5x16xf32>
    %c0_6 = arith.constant 0 : index
    %c32 = arith.constant 32 : index
    %18 = vector.load %arg6[%c0_6, %c32] : memref<96x128xf32, #tpu.memory_space<vmem>>, vector<16x32xf32>
    %cst_7 = arith.constant dense<0.000000e+00> : vector<5x32xf32>
    %19 = tpu.matmul %17, %18, %cst_7 {dimension_numbers = #tpu.dot_dimension_numbers<[1], [0], [0], [1], [0, 0, 1, 1], [], []>} : vector<5x16xf32>, vector<16x32xf32>, vector<5x32xf32> -> vector<5x32xf32>
    %c24 = arith.constant 24 : index
    %c32_8 = arith.constant 32 : index
    %20 = vector.load %arg6[%c24, %c32_8] : memref<96x128xf32, #tpu.memory_space<vmem>>, vector<1x32xf32>
    %21 = vector.broadcast %20 : vector<1x32xf32> to vector<5x32xf32>
    %22 = arith.addf %19, %21 : vector<5x32xf32>
    %23 = vector.extract_strided_slice %22 {offsets = [0, 0], sizes = [4, 32], strides = [1, 1]} : vector<5x32xf32> to vector<4x32xf32>
    %24 = vector.extract_strided_slice %22 {offsets = [4, 0], sizes = [1, 32], strides = [1, 1]} : vector<5x32xf32> to vector<1x32xf32>
    %c0_9 = arith.constant 0 : index
    %c0_10 = arith.constant 0 : index
    %c0_11 = arith.constant 0 : index
    %25 = vector.load %arg2[%c0_9, %c0_10, %c0_11] : memref<1x12x8xf32, #tpu.memory_space<vmem>>, vector<1x12x8xf32>
    %26 = vector.shape_cast %25 : vector<1x12x8xf32> to vector<12x8xf32>
    %c40 = arith.constant 40 : index
    %c0_12 = arith.constant 0 : index
    %27 = vector.load %arg4[%c40, %c0_12] : memref<48x128xf32, #tpu.memory_space<vmem>>, vector<1x8xf32>
    %c40_13 = arith.constant 40 : index
    %c8 = arith.constant 8 : index
    %28 = vector.load %arg4[%c40_13, %c8] : memref<48x128xf32, #tpu.memory_space<vmem>>, vector<1x8xf32>
    %cst_14 = arith.constant dense<0.000000e+00> : vector<12xf32>
    %29 = vector.multi_reduction <add>, %26, %cst_14 [1] : vector<12x8xf32> to vector<12xf32>
    %30 = vector.shape_cast %29 : vector<12xf32> to vector<12x1xf32>
    %cst_15 = arith.constant 8.000000e+00 : f32
    %31 = vector.broadcast %cst_15 : f32 to vector<12x1xf32>
    %32 = arith.divf %30, %31 : vector<12x1xf32>
    %33 = vector.broadcast %32 : vector<12x1xf32> to vector<12x8xf32>
    %34 = arith.subf %26, %33 : vector<12x8xf32>
    %35 = arith.mulf %34, %34 : vector<12x8xf32>
    %cst_16 = arith.constant dense<0.000000e+00> : vector<12xf32>
    %36 = vector.multi_reduction <add>, %35, %cst_16 [1] : vector<12x8xf32> to vector<12xf32>
    %37 = vector.shape_cast %36 : vector<12xf32> to vector<12x1xf32>
    %cst_17 = arith.constant 8.000000e+00 : f32
    %38 = vector.broadcast %cst_17 : f32 to vector<12x1xf32>
    %39 = arith.divf %37, %38 : vector<12x1xf32>
    %40 = vector.broadcast %32 : vector<12x1xf32> to vector<12x8xf32>
    %41 = arith.subf %26, %40 : vector<12x8xf32>
    %cst_18 = arith.constant 9.99999974E-6 : f32
    %42 = vector.broadcast %cst_18 : f32 to vector<12x1xf32>
    %43 = arith.addf %39, %42 : vector<12x1xf32>
    %44 = math.rsqrt %43 : vector<12x1xf32>
    %45 = vector.broadcast %44 : vector<12x1xf32> to vector<12x8xf32>
    %46 = arith.mulf %41, %45 : vector<12x8xf32>
    %47 = vector.broadcast %27 : vector<1x8xf32> to vector<12x8xf32>
    %48 = arith.mulf %46, %47 : vector<12x8xf32>
    %49 = vector.broadcast %28 : vector<1x8xf32> to vector<12x8xf32>
    %50 = arith.addf %48, %49 : vector<12x8xf32>
    %cst_19 = arith.constant dense<0.000000e+00> : vector<4xf32>
    %51 = vector.multi_reduction <add>, %23, %cst_19 [1] : vector<4x32xf32> to vector<4xf32>
    %52 = vector.shape_cast %51 : vector<4xf32> to vector<4x1xf32>
    %cst_20 = arith.constant 3.200000e+01 : f32
    %53 = vector.broadcast %cst_20 : f32 to vector<4x1xf32>
    %54 = arith.divf %52, %53 : vector<4x1xf32>
    %55 = vector.broadcast %54 : vector<4x1xf32> to vector<4x32xf32>
    %56 = arith.subf %23, %55 : vector<4x32xf32>
    %57 = arith.mulf %56, %56 : vector<4x32xf32>
    %cst_21 = arith.constant dense<0.000000e+00> : vector<4xf32>
    %58 = vector.multi_reduction <add>, %57, %cst_21 [1] : vector<4x32xf32> to vector<4xf32>
    %59 = vector.shape_cast %58 : vector<4xf32> to vector<4x1xf32>
    %cst_22 = arith.constant 3.200000e+01 : f32
    %60 = vector.broadcast %cst_22 : f32 to vector<4x1xf32>
    %61 = arith.divf %59, %60 : vector<4x1xf32>
    %62 = vector.broadcast %54 : vector<4x1xf32> to vector<4x32xf32>
    %63 = arith.subf %23, %62 : vector<4x32xf32>
    %cst_23 = arith.constant 9.99999974E-6 : f32
    %64 = vector.broadcast %cst_23 : f32 to vector<4x1xf32>
    %65 = arith.addf %61, %64 : vector<4x1xf32>
    %66 = math.rsqrt %65 : vector<4x1xf32>
    %67 = vector.broadcast %66 : vector<4x1xf32> to vector<4x32xf32>
    %68 = arith.mulf %63, %67 : vector<4x32xf32>
    %c0_24 = arith.constant 0 : index
    %c0_25 = arith.constant 0 : index
    %69 = vector.load %arg4[%c0_24, %c0_25] : memref<48x128xf32, #tpu.memory_space<vmem>>, vector<8x40xf32>
    %cst_26 = arith.constant dense<0.000000e+00> : vector<12x40xf32>
    %70 = tpu.matmul %50, %69, %cst_26 {dimension_numbers = #tpu.dot_dimension_numbers<[1], [0], [0], [1], [0, 0, 1, 1], [], []>} : vector<12x8xf32>, vector<8x40xf32>, vector<12x40xf32> -> vector<12x40xf32>
    %c8_27 = arith.constant 8 : index
    %c0_28 = arith.constant 0 : index
    %71 = vector.load %arg4[%c8_27, %c0_28] : memref<48x128xf32, #tpu.memory_space<vmem>>, vector<32x64xf32>
    %cst_29 = arith.constant dense<0.000000e+00> : vector<4x64xf32>
    %72 = tpu.matmul %68, %71, %cst_29 {dimension_numbers = #tpu.dot_dimension_numbers<[1], [0], [0], [1], [0, 0, 1, 1], [], []>} : vector<4x32xf32>, vector<32x64xf32>, vector<4x64xf32> -> vector<4x64xf32>
    %c40_30 = arith.constant 40 : index
    %c16 = arith.constant 16 : index
    %73 = vector.load %arg4[%c40_30, %c16] : memref<48x128xf32, #tpu.memory_space<vmem>>, vector<1x64xf32>
    %74 = vector.broadcast %73 : vector<1x64xf32> to vector<4x64xf32>
    %75 = arith.addf %72, %74 : vector<4x64xf32>
    %76 = vector.extract_strided_slice %70 {offsets = [0, 0], sizes = [12, 32], strides = [1, 1]} : vector<12x40xf32> to vector<12x32xf32>
    %77 = vector.extract_strided_slice %70 {offsets = [0, 32], sizes = [12, 8], strides = [1, 1]} : vector<12x40xf32> to vector<12x8xf32>
    %78 = vector.extract_strided_slice %75 {offsets = [0, 0], sizes = [4, 32], strides = [1, 1]} : vector<4x64xf32> to vector<4x32xf32>
    %79 = vector.extract_strided_slice %75 {offsets = [0, 32], sizes = [4, 32], strides = [1, 1]} : vector<4x64xf32> to vector<4x32xf32>
    %80 = vector.extract_strided_slice %76 {offsets = [0, 0], sizes = [12, 8], strides = [1, 1]} : vector<12x32xf32> to vector<12x8xf32>
    %81 = vector.extract_strided_slice %78 {offsets = [0, 0], sizes = [4, 8], strides = [1, 1]} : vector<4x32xf32> to vector<4x8xf32>
    %cst_31 = arith.constant dense<0.000000e+00> : vector<12x4xf32>
    %82 = tpu.matmul %80, %81, %cst_31 {dimension_numbers = #tpu.dot_dimension_numbers<[1], [1], [0], [0], [0, 0, 1, 0], [], []>} : vector<12x8xf32>, vector<4x8xf32>, vector<12x4xf32> -> vector<12x4xf32>
    %83 = vector.extract_strided_slice %76 {offsets = [0, 8], sizes = [12, 8], strides = [1, 1]} : vector<12x32xf32> to vector<12x8xf32>
    %84 = vector.extract_strided_slice %78 {offsets = [0, 8], sizes = [4, 8], strides = [1, 1]} : vector<4x32xf32> to vector<4x8xf32>
    %cst_32 = arith.constant dense<0.000000e+00> : vector<12x4xf32>
    %85 = tpu.matmul %83, %84, %cst_32 {dimension_numbers = #tpu.dot_dimension_numbers<[1], [1], [0], [0], [0, 0, 1, 0], [], []>} : vector<12x8xf32>, vector<4x8xf32>, vector<12x4xf32> -> vector<12x4xf32>
    %86 = vector.extract_strided_slice %76 {offsets = [0, 16], sizes = [12, 8], strides = [1, 1]} : vector<12x32xf32> to vector<12x8xf32>
    %87 = vector.extract_strided_slice %78 {offsets = [0, 16], sizes = [4, 8], strides = [1, 1]} : vector<4x32xf32> to vector<4x8xf32>
    %cst_33 = arith.constant dense<0.000000e+00> : vector<12x4xf32>
    %88 = tpu.matmul %86, %87, %cst_33 {dimension_numbers = #tpu.dot_dimension_numbers<[1], [1], [0], [0], [0, 0, 1, 0], [], []>} : vector<12x8xf32>, vector<4x8xf32>, vector<12x4xf32> -> vector<12x4xf32>
    %89 = vector.extract_strided_slice %76 {offsets = [0, 24], sizes = [12, 8], strides = [1, 1]} : vector<12x32xf32> to vector<12x8xf32>
    %90 = vector.extract_strided_slice %78 {offsets = [0, 24], sizes = [4, 8], strides = [1, 1]} : vector<4x32xf32> to vector<4x8xf32>
    %cst_34 = arith.constant dense<0.000000e+00> : vector<12x4xf32>
    %91 = tpu.matmul %89, %90, %cst_34 {dimension_numbers = #tpu.dot_dimension_numbers<[1], [1], [0], [0], [0, 0, 1, 0], [], []>} : vector<12x8xf32>, vector<4x8xf32>, vector<12x4xf32> -> vector<12x4xf32>
    %92 = arith.maximumf %82, %85 : vector<12x4xf32>
    %93 = arith.maximumf %92, %88 : vector<12x4xf32>
    %94 = arith.maximumf %93, %91 : vector<12x4xf32>
    %95 = arith.subf %82, %94 : vector<12x4xf32>
    %96 = math.exp %95 : vector<12x4xf32>
    %97 = arith.subf %85, %94 : vector<12x4xf32>
    %98 = math.exp %97 : vector<12x4xf32>
    %99 = arith.subf %88, %94 : vector<12x4xf32>
    %100 = math.exp %99 : vector<12x4xf32>
    %101 = arith.subf %91, %94 : vector<12x4xf32>
    %102 = math.exp %101 : vector<12x4xf32>
    %103 = arith.addf %96, %98 : vector<12x4xf32>
    %104 = arith.addf %103, %100 : vector<12x4xf32>
    %105 = arith.addf %104, %102 : vector<12x4xf32>
    %cst_35 = arith.constant 1.000000e+00 : f32
    %106 = vector.broadcast %cst_35 : f32 to vector<12x4xf32>
    %107 = arith.divf %106, %105 : vector<12x4xf32>
    %108 = arith.mulf %96, %107 : vector<12x4xf32>
    %109 = vector.extract_strided_slice %79 {offsets = [0, 0], sizes = [4, 8], strides = [1, 1]} : vector<4x32xf32> to vector<4x8xf32>
    %cst_36 = arith.constant dense<0.000000e+00> : vector<12x8xf32>
    %110 = tpu.matmul %108, %109, %cst_36 {dimension_numbers = #tpu.dot_dimension_numbers<[1], [0], [0], [1], [0, 0, 1, 1], [], []>} : vector<12x4xf32>, vector<4x8xf32>, vector<12x8xf32> -> vector<12x8xf32>
    %111 = arith.mulf %98, %107 : vector<12x4xf32>
    %112 = vector.extract_strided_slice %79 {offsets = [0, 8], sizes = [4, 8], strides = [1, 1]} : vector<4x32xf32> to vector<4x8xf32>
    %cst_37 = arith.constant dense<0.000000e+00> : vector<12x8xf32>
    %113 = tpu.matmul %111, %112, %cst_37 {dimension_numbers = #tpu.dot_dimension_numbers<[1], [0], [0], [1], [0, 0, 1, 1], [], []>} : vector<12x4xf32>, vector<4x8xf32>, vector<12x8xf32> -> vector<12x8xf32>
    %114 = arith.mulf %100, %107 : vector<12x4xf32>
    %115 = vector.extract_strided_slice %79 {offsets = [0, 16], sizes = [4, 8], strides = [1, 1]} : vector<4x32xf32> to vector<4x8xf32>
    %cst_38 = arith.constant dense<0.000000e+00> : vector<12x8xf32>
    %116 = tpu.matmul %114, %115, %cst_38 {dimension_numbers = #tpu.dot_dimension_numbers<[1], [0], [0], [1], [0, 0, 1, 1], [], []>} : vector<12x4xf32>, vector<4x8xf32>, vector<12x8xf32> -> vector<12x8xf32>
    %117 = arith.mulf %102, %107 : vector<12x4xf32>
    %118 = vector.extract_strided_slice %79 {offsets = [0, 24], sizes = [4, 8], strides = [1, 1]} : vector<4x32xf32> to vector<4x8xf32>
    %cst_39 = arith.constant dense<0.000000e+00> : vector<12x8xf32>
    %119 = tpu.matmul %117, %118, %cst_39 {dimension_numbers = #tpu.dot_dimension_numbers<[1], [0], [0], [1], [0, 0, 1, 1], [], []>} : vector<12x4xf32>, vector<4x8xf32>, vector<12x8xf32> -> vector<12x8xf32>
    %120 = tpu.concatenate %110, %113, %116, %119 in 1 : vector<12x8xf32>, vector<12x8xf32>, vector<12x8xf32>, vector<12x8xf32> -> vector<12x32xf32>
    %c8_40 = arith.constant 8 : index
    %c64 = arith.constant 64 : index
    %121 = vector.load %arg4[%c8_40, %c64] : memref<48x128xf32, #tpu.memory_space<vmem>>, vector<32x16xf32>
    %cst_41 = arith.constant dense<0.000000e+00> : vector<12x16xf32>
    %122 = tpu.matmul %120, %121, %cst_41 {dimension_numbers = #tpu.dot_dimension_numbers<[1], [0], [0], [1], [0, 0, 1, 1], [], []>} : vector<12x32xf32>, vector<32x16xf32>, vector<12x16xf32> -> vector<12x16xf32>
    %c40_42 = arith.constant 40 : index
    %c80 = arith.constant 80 : index
    %123 = vector.load %arg4[%c40_42, %c80] : memref<48x128xf32, #tpu.memory_space<vmem>>, vector<1x16xf32>
    %124 = vector.broadcast %123 : vector<1x16xf32> to vector<12x16xf32>
    %125 = arith.addf %122, %124 : vector<12x16xf32>
    %126 = vector.extract_strided_slice %125 {offsets = [0, 0], sizes = [12, 8], strides = [1, 1]} : vector<12x16xf32> to vector<12x8xf32>
    %127 = vector.extract_strided_slice %125 {offsets = [0, 8], sizes = [12, 8], strides = [1, 1]} : vector<12x16xf32> to vector<12x8xf32>
    %128 = arith.addf %77, %127 : vector<12x8xf32>
    %cst_43 = arith.constant 0.000000e+00 : f32
    %129 = vector.broadcast %cst_43 : f32 to vector<12x8xf32>
    %130 = arith.subf %129, %128 : vector<12x8xf32>
    %131 = math.exp %130 : vector<12x8xf32>
    %cst_44 = arith.constant 1.000000e+00 : f32
    %132 = vector.broadcast %cst_44 : f32 to vector<12x8xf32>
    %133 = arith.addf %132, %131 : vector<12x8xf32>
    %cst_45 = arith.constant 1.000000e+00 : f32
    %134 = vector.broadcast %cst_45 : f32 to vector<12x8xf32>
    %135 = arith.divf %134, %133 : vector<12x8xf32>
    %136 = arith.mulf %135, %50 : vector<12x8xf32>
    %cst_46 = arith.constant 1.000000e+00 : f32
    %137 = vector.broadcast %cst_46 : f32 to vector<12x8xf32>
    %138 = arith.subf %137, %135 : vector<12x8xf32>
    %139 = arith.mulf %138, %126 : vector<12x8xf32>
    %140 = arith.addf %136, %139 : vector<12x8xf32>
    %141 = vector.extract_strided_slice %140 {offsets = [0, 0], sizes = [3, 8], strides = [1, 1]} : vector<12x8xf32> to vector<3x8xf32>
    %cst_47 = arith.constant dense<0xFF800000> : vector<8xf32>
    %142 = vector.multi_reduction <maximumf>, %141, %cst_47 [0] : vector<3x8xf32> to vector<8xf32>
    %143 = vector.shape_cast %142 : vector<8xf32> to vector<1x8xf32>
    %144 = vector.extract_strided_slice %140 {offsets = [3, 0], sizes = [3, 8], strides = [1, 1]} : vector<12x8xf32> to vector<3x8xf32>
    %cst_48 = arith.constant dense<0xFF800000> : vector<8xf32>
    %145 = vector.multi_reduction <maximumf>, %144, %cst_48 [0] : vector<3x8xf32> to vector<8xf32>
    %146 = vector.shape_cast %145 : vector<8xf32> to vector<1x8xf32>
    %147 = vector.extract_strided_slice %140 {offsets = [6, 0], sizes = [3, 8], strides = [1, 1]} : vector<12x8xf32> to vector<3x8xf32>
    %cst_49 = arith.constant dense<0xFF800000> : vector<8xf32>
    %148 = vector.multi_reduction <maximumf>, %147, %cst_49 [0] : vector<3x8xf32> to vector<8xf32>
    %149 = vector.shape_cast %148 : vector<8xf32> to vector<1x8xf32>
    %150 = vector.extract_strided_slice %140 {offsets = [9, 0], sizes = [3, 8], strides = [1, 1]} : vector<12x8xf32> to vector<3x8xf32>
    %cst_50 = arith.constant dense<0xFF800000> : vector<8xf32>
    %151 = vector.multi_reduction <maximumf>, %150, %cst_50 [0] : vector<3x8xf32> to vector<8xf32>
    %152 = vector.shape_cast %151 : vector<8xf32> to vector<1x8xf32>
    %153 = tpu.concatenate %143, %146, %149, %152 in 0 : vector<1x8xf32>, vector<1x8xf32>, vector<1x8xf32>, vector<1x8xf32> -> vector<4x8xf32>
    %c16_51 = arith.constant 16 : index
    %c32_52 = arith.constant 32 : index
    %154 = vector.load %arg6[%c16_51, %c32_52] : memref<96x128xf32, #tpu.memory_space<vmem>>, vector<8x32xf32>
    %cst_53 = arith.constant dense<0.000000e+00> : vector<4x32xf32>
    %155 = tpu.matmul %153, %154, %cst_53 {dimension_numbers = #tpu.dot_dimension_numbers<[1], [0], [0], [1], [0, 0, 1, 1], [], []>} : vector<4x8xf32>, vector<8x32xf32>, vector<4x32xf32> -> vector<4x32xf32>
    %c24_54 = arith.constant 24 : index
    %c64_55 = arith.constant 64 : index
    %156 = vector.load %arg6[%c24_54, %c64_55] : memref<96x128xf32, #tpu.memory_space<vmem>>, vector<1x32xf32>
    %157 = vector.broadcast %156 : vector<1x32xf32> to vector<4x32xf32>
    %158 = arith.addf %155, %157 : vector<4x32xf32>
    %c40_56 = arith.constant 40 : index
    %c0_57 = arith.constant 0 : index
    %159 = vector.load %arg5[%c40_56, %c0_57] : memref<48x128xf32, #tpu.memory_space<vmem>>, vector<1x8xf32>
    %c40_58 = arith.constant 40 : index
    %c8_59 = arith.constant 8 : index
    %160 = vector.load %arg5[%c40_58, %c8_59] : memref<48x128xf32, #tpu.memory_space<vmem>>, vector<1x8xf32>
    %cst_60 = arith.constant dense<0.000000e+00> : vector<12xf32>
    %161 = vector.multi_reduction <add>, %140, %cst_60 [1] : vector<12x8xf32> to vector<12xf32>
    %162 = vector.shape_cast %161 : vector<12xf32> to vector<12x1xf32>
    %cst_61 = arith.constant 8.000000e+00 : f32
    %163 = vector.broadcast %cst_61 : f32 to vector<12x1xf32>
    %164 = arith.divf %162, %163 : vector<12x1xf32>
    %165 = vector.broadcast %164 : vector<12x1xf32> to vector<12x8xf32>
    %166 = arith.subf %140, %165 : vector<12x8xf32>
    %167 = arith.mulf %166, %166 : vector<12x8xf32>
    %cst_62 = arith.constant dense<0.000000e+00> : vector<12xf32>
    %168 = vector.multi_reduction <add>, %167, %cst_62 [1] : vector<12x8xf32> to vector<12xf32>
    %169 = vector.shape_cast %168 : vector<12xf32> to vector<12x1xf32>
    %cst_63 = arith.constant 8.000000e+00 : f32
    %170 = vector.broadcast %cst_63 : f32 to vector<12x1xf32>
    %171 = arith.divf %169, %170 : vector<12x1xf32>
    %172 = vector.broadcast %164 : vector<12x1xf32> to vector<12x8xf32>
    %173 = arith.subf %140, %172 : vector<12x8xf32>
    %cst_64 = arith.constant 9.99999974E-6 : f32
    %174 = vector.broadcast %cst_64 : f32 to vector<12x1xf32>
    %175 = arith.addf %171, %174 : vector<12x1xf32>
    %176 = math.rsqrt %175 : vector<12x1xf32>
    %177 = vector.broadcast %176 : vector<12x1xf32> to vector<12x8xf32>
    %178 = arith.mulf %173, %177 : vector<12x8xf32>
    %179 = vector.broadcast %159 : vector<1x8xf32> to vector<12x8xf32>
    %180 = arith.mulf %178, %179 : vector<12x8xf32>
    %181 = vector.broadcast %160 : vector<1x8xf32> to vector<12x8xf32>
    %182 = arith.addf %180, %181 : vector<12x8xf32>
    %cst_65 = arith.constant dense<0.000000e+00> : vector<4xf32>
    %183 = vector.multi_reduction <add>, %158, %cst_65 [1] : vector<4x32xf32> to vector<4xf32>
    %184 = vector.shape_cast %183 : vector<4xf32> to vector<4x1xf32>
    %cst_66 = arith.constant 3.200000e+01 : f32
    %185 = vector.broadcast %cst_66 : f32 to vector<4x1xf32>
    %186 = arith.divf %184, %185 : vector<4x1xf32>
    %187 = vector.broadcast %186 : vector<4x1xf32> to vector<4x32xf32>
    %188 = arith.subf %158, %187 : vector<4x32xf32>
    %189 = arith.mulf %188, %188 : vector<4x32xf32>
    %cst_67 = arith.constant dense<0.000000e+00> : vector<4xf32>
    %190 = vector.multi_reduction <add>, %189, %cst_67 [1] : vector<4x32xf32> to vector<4xf32>
    %191 = vector.shape_cast %190 : vector<4xf32> to vector<4x1xf32>
    %cst_68 = arith.constant 3.200000e+01 : f32
    %192 = vector.broadcast %cst_68 : f32 to vector<4x1xf32>
    %193 = arith.divf %191, %192 : vector<4x1xf32>
    %194 = vector.broadcast %186 : vector<4x1xf32> to vector<4x32xf32>
    %195 = arith.subf %158, %194 : vector<4x32xf32>
    %cst_69 = arith.constant 9.99999974E-6 : f32
    %196 = vector.broadcast %cst_69 : f32 to vector<4x1xf32>
    %197 = arith.addf %193, %196 : vector<4x1xf32>
    %198 = math.rsqrt %197 : vector<4x1xf32>
    %199 = vector.broadcast %198 : vector<4x1xf32> to vector<4x32xf32>
    %200 = arith.mulf %195, %199 : vector<4x32xf32>
    %c0_70 = arith.constant 0 : index
    %c0_71 = arith.constant 0 : index
    %201 = vector.load %arg5[%c0_70, %c0_71] : memref<48x128xf32, #tpu.memory_space<vmem>>, vector<8x40xf32>
    %cst_72 = arith.constant dense<0.000000e+00> : vector<12x40xf32>
    %202 = tpu.matmul %182, %201, %cst_72 {dimension_numbers = #tpu.dot_dimension_numbers<[1], [0], [0], [1], [0, 0, 1, 1], [], []>} : vector<12x8xf32>, vector<8x40xf32>, vector<12x40xf32> -> vector<12x40xf32>
    %c8_73 = arith.constant 8 : index
    %c0_74 = arith.constant 0 : index
    %203 = vector.load %arg5[%c8_73, %c0_74] : memref<48x128xf32, #tpu.memory_space<vmem>>, vector<32x64xf32>
    %cst_75 = arith.constant dense<0.000000e+00> : vector<4x64xf32>
    %204 = tpu.matmul %200, %203, %cst_75 {dimension_numbers = #tpu.dot_dimension_numbers<[1], [0], [0], [1], [0, 0, 1, 1], [], []>} : vector<4x32xf32>, vector<32x64xf32>, vector<4x64xf32> -> vector<4x64xf32>
    %c40_76 = arith.constant 40 : index
    %c16_77 = arith.constant 16 : index
    %205 = vector.load %arg5[%c40_76, %c16_77] : memref<48x128xf32, #tpu.memory_space<vmem>>, vector<1x64xf32>
    %206 = vector.broadcast %205 : vector<1x64xf32> to vector<4x64xf32>
    %207 = arith.addf %204, %206 : vector<4x64xf32>
    %208 = vector.extract_strided_slice %202 {offsets = [0, 0], sizes = [12, 32], strides = [1, 1]} : vector<12x40xf32> to vector<12x32xf32>
    %209 = vector.extract_strided_slice %202 {offsets = [0, 32], sizes = [12, 8], strides = [1, 1]} : vector<12x40xf32> to vector<12x8xf32>
    %210 = vector.extract_strided_slice %207 {offsets = [0, 0], sizes = [4, 32], strides = [1, 1]} : vector<4x64xf32> to vector<4x32xf32>
    %211 = vector.extract_strided_slice %207 {offsets = [0, 32], sizes = [4, 32], strides = [1, 1]} : vector<4x64xf32> to vector<4x32xf32>
    %212 = vector.extract_strided_slice %208 {offsets = [0, 0], sizes = [12, 8], strides = [1, 1]} : vector<12x32xf32> to vector<12x8xf32>
    %213 = vector.extract_strided_slice %210 {offsets = [0, 0], sizes = [4, 8], strides = [1, 1]} : vector<4x32xf32> to vector<4x8xf32>
    %cst_78 = arith.constant dense<0.000000e+00> : vector<12x4xf32>
    %214 = tpu.matmul %212, %213, %cst_78 {dimension_numbers = #tpu.dot_dimension_numbers<[1], [1], [0], [0], [0, 0, 1, 0], [], []>} : vector<12x8xf32>, vector<4x8xf32>, vector<12x4xf32> -> vector<12x4xf32>
    %215 = vector.extract_strided_slice %208 {offsets = [0, 8], sizes = [12, 8], strides = [1, 1]} : vector<12x32xf32> to vector<12x8xf32>
    %216 = vector.extract_strided_slice %210 {offsets = [0, 8], sizes = [4, 8], strides = [1, 1]} : vector<4x32xf32> to vector<4x8xf32>
    %cst_79 = arith.constant dense<0.000000e+00> : vector<12x4xf32>
    %217 = tpu.matmul %215, %216, %cst_79 {dimension_numbers = #tpu.dot_dimension_numbers<[1], [1], [0], [0], [0, 0, 1, 0], [], []>} : vector<12x8xf32>, vector<4x8xf32>, vector<12x4xf32> -> vector<12x4xf32>
    %218 = vector.extract_strided_slice %208 {offsets = [0, 16], sizes = [12, 8], strides = [1, 1]} : vector<12x32xf32> to vector<12x8xf32>
    %219 = vector.extract_strided_slice %210 {offsets = [0, 16], sizes = [4, 8], strides = [1, 1]} : vector<4x32xf32> to vector<4x8xf32>
    %cst_80 = arith.constant dense<0.000000e+00> : vector<12x4xf32>
    %220 = tpu.matmul %218, %219, %cst_80 {dimension_numbers = #tpu.dot_dimension_numbers<[1], [1], [0], [0], [0, 0, 1, 0], [], []>} : vector<12x8xf32>, vector<4x8xf32>, vector<12x4xf32> -> vector<12x4xf32>
    %221 = vector.extract_strided_slice %208 {offsets = [0, 24], sizes = [12, 8], strides = [1, 1]} : vector<12x32xf32> to vector<12x8xf32>
    %222 = vector.extract_strided_slice %210 {offsets = [0, 24], sizes = [4, 8], strides = [1, 1]} : vector<4x32xf32> to vector<4x8xf32>
    %cst_81 = arith.constant dense<0.000000e+00> : vector<12x4xf32>
    %223 = tpu.matmul %221, %222, %cst_81 {dimension_numbers = #tpu.dot_dimension_numbers<[1], [1], [0], [0], [0, 0, 1, 0], [], []>} : vector<12x8xf32>, vector<4x8xf32>, vector<12x4xf32> -> vector<12x4xf32>
    %224 = arith.maximumf %214, %217 : vector<12x4xf32>
    %225 = arith.maximumf %224, %220 : vector<12x4xf32>
    %226 = arith.maximumf %225, %223 : vector<12x4xf32>
    %227 = arith.subf %214, %226 : vector<12x4xf32>
    %228 = math.exp %227 : vector<12x4xf32>
    %229 = arith.subf %217, %226 : vector<12x4xf32>
    %230 = math.exp %229 : vector<12x4xf32>
    %231 = arith.subf %220, %226 : vector<12x4xf32>
    %232 = math.exp %231 : vector<12x4xf32>
    %233 = arith.subf %223, %226 : vector<12x4xf32>
    %234 = math.exp %233 : vector<12x4xf32>
    %235 = arith.addf %228, %230 : vector<12x4xf32>
    %236 = arith.addf %235, %232 : vector<12x4xf32>
    %237 = arith.addf %236, %234 : vector<12x4xf32>
    %cst_82 = arith.constant 1.000000e+00 : f32
    %238 = vector.broadcast %cst_82 : f32 to vector<12x4xf32>
    %239 = arith.divf %238, %237 : vector<12x4xf32>
    %240 = arith.mulf %228, %239 : vector<12x4xf32>
    %241 = vector.extract_strided_slice %211 {offsets = [0, 0], sizes = [4, 8], strides = [1, 1]} : vector<4x32xf32> to vector<4x8xf32>
    %cst_83 = arith.constant dense<0.000000e+00> : vector<12x8xf32>
    %242 = tpu.matmul %240, %241, %cst_83 {dimension_numbers = #tpu.dot_dimension_numbers<[1], [0], [0], [1], [0, 0, 1, 1], [], []>} : vector<12x4xf32>, vector<4x8xf32>, vector<12x8xf32> -> vector<12x8xf32>
    %243 = arith.mulf %230, %239 : vector<12x4xf32>
    %244 = vector.extract_strided_slice %211 {offsets = [0, 8], sizes = [4, 8], strides = [1, 1]} : vector<4x32xf32> to vector<4x8xf32>
    %cst_84 = arith.constant dense<0.000000e+00> : vector<12x8xf32>
    %245 = tpu.matmul %243, %244, %cst_84 {dimension_numbers = #tpu.dot_dimension_numbers<[1], [0], [0], [1], [0, 0, 1, 1], [], []>} : vector<12x4xf32>, vector<4x8xf32>, vector<12x8xf32> -> vector<12x8xf32>
    %246 = arith.mulf %232, %239 : vector<12x4xf32>
    %247 = vector.extract_strided_slice %211 {offsets = [0, 16], sizes = [4, 8], strides = [1, 1]} : vector<4x32xf32> to vector<4x8xf32>
    %cst_85 = arith.constant dense<0.000000e+00> : vector<12x8xf32>
    %248 = tpu.matmul %246, %247, %cst_85 {dimension_numbers = #tpu.dot_dimension_numbers<[1], [0], [0], [1], [0, 0, 1, 1], [], []>} : vector<12x4xf32>, vector<4x8xf32>, vector<12x8xf32> -> vector<12x8xf32>
    %249 = arith.mulf %234, %239 : vector<12x4xf32>
    %250 = vector.extract_strided_slice %211 {offsets = [0, 24], sizes = [4, 8], strides = [1, 1]} : vector<4x32xf32> to vector<4x8xf32>
    %cst_86 = arith.constant dense<0.000000e+00> : vector<12x8xf32>
    %251 = tpu.matmul %249, %250, %cst_86 {dimension_numbers = #tpu.dot_dimension_numbers<[1], [0], [0], [1], [0, 0, 1, 1], [], []>} : vector<12x4xf32>, vector<4x8xf32>, vector<12x8xf32> -> vector<12x8xf32>
    %252 = tpu.concatenate %242, %245, %248, %251 in 1 : vector<12x8xf32>, vector<12x8xf32>, vector<12x8xf32>, vector<12x8xf32> -> vector<12x32xf32>
    %c8_87 = arith.constant 8 : index
    %c64_88 = arith.constant 64 : index
    %253 = vector.load %arg5[%c8_87, %c64_88] : memref<48x128xf32, #tpu.memory_space<vmem>>, vector<32x16xf32>
    %cst_89 = arith.constant dense<0.000000e+00> : vector<12x16xf32>
    %254 = tpu.matmul %252, %253, %cst_89 {dimension_numbers = #tpu.dot_dimension_numbers<[1], [0], [0], [1], [0, 0, 1, 1], [], []>} : vector<12x32xf32>, vector<32x16xf32>, vector<12x16xf32> -> vector<12x16xf32>
    %c40_90 = arith.constant 40 : index
    %c80_91 = arith.constant 80 : index
    %255 = vector.load %arg5[%c40_90, %c80_91] : memref<48x128xf32, #tpu.memory_space<vmem>>, vector<1x16xf32>
    %256 = vector.broadcast %255 : vector<1x16xf32> to vector<12x16xf32>
    %257 = arith.addf %254, %256 : vector<12x16xf32>
    %258 = vector.extract_strided_slice %257 {offsets = [0, 0], sizes = [12, 8], strides = [1, 1]} : vector<12x16xf32> to vector<12x8xf32>
    %259 = vector.extract_strided_slice %257 {offsets = [0, 8], sizes = [12, 8], strides = [1, 1]} : vector<12x16xf32> to vector<12x8xf32>
    %260 = arith.addf %209, %259 : vector<12x8xf32>
    %cst_92 = arith.constant 0.000000e+00 : f32
    %261 = vector.broadcast %cst_92 : f32 to vector<12x8xf32>
    %262 = arith.subf %261, %260 : vector<12x8xf32>
    %263 = math.exp %262 : vector<12x8xf32>
    %cst_93 = arith.constant 1.000000e+00 : f32
    %264 = vector.broadcast %cst_93 : f32 to vector<12x8xf32>
    %265 = arith.addf %264, %263 : vector<12x8xf32>
    %cst_94 = arith.constant 1.000000e+00 : f32
    %266 = vector.broadcast %cst_94 : f32 to vector<12x8xf32>
    %267 = arith.divf %266, %265 : vector<12x8xf32>
    %268 = arith.mulf %267, %182 : vector<12x8xf32>
    %cst_95 = arith.constant 1.000000e+00 : f32
    %269 = vector.broadcast %cst_95 : f32 to vector<12x8xf32>
    %270 = arith.subf %269, %267 : vector<12x8xf32>
    %271 = arith.mulf %270, %258 : vector<12x8xf32>
    %272 = arith.addf %268, %271 : vector<12x8xf32>
    %c16_96 = arith.constant 16 : index
    %c32_97 = arith.constant 32 : index
    %273 = vector.load %arg6[%c16_96, %c32_97] : memref<96x128xf32, #tpu.memory_space<vmem>>, vector<8x32xf32>
    %cst_98 = arith.constant dense<0.000000e+00> : vector<12x32xf32>
    %274 = tpu.matmul %272, %273, %cst_98 {dimension_numbers = #tpu.dot_dimension_numbers<[1], [0], [0], [1], [0, 0, 1, 1], [], []>} : vector<12x8xf32>, vector<8x32xf32>, vector<12x32xf32> -> vector<12x32xf32>
    %c24_99 = arith.constant 24 : index
    %c64_100 = arith.constant 64 : index
    %275 = vector.load %arg6[%c24_99, %c64_100] : memref<96x128xf32, #tpu.memory_space<vmem>>, vector<1x32xf32>
    %276 = vector.broadcast %275 : vector<1x32xf32> to vector<12x32xf32>
    %277 = arith.addf %274, %276 : vector<12x32xf32>
    %cst_101 = arith.constant dense<0xFF800000> : vector<32xf32>
    %278 = vector.multi_reduction <maximumf>, %277, %cst_101 [0] : vector<12x32xf32> to vector<32xf32>
    %279 = vector.shape_cast %278 : vector<32xf32> to vector<1x32xf32>
    %280 = arith.mulf %279, %24 : vector<1x32xf32>
    %281 = tpu.concatenate %24, %279, %280 in 1 : vector<1x32xf32>, vector<1x32xf32>, vector<1x32xf32> -> vector<1x96xf32>
    %c0_102 = arith.constant 0 : index
    %c0_103 = arith.constant 0 : index
    %282 = vector.load %arg3[%c0_102, %c0_103] : memref<8x128xf32, #tpu.memory_space<vmem>>, vector<1x128xf32>
    %c0_104 = arith.constant 0 : index
    %c0_105 = arith.constant 0 : index
    %283 = vector.load %arg6[%c0_104, %c0_105] : memref<96x128xf32, #tpu.memory_space<vmem>>, vector<96x32xf32>
    %cst_106 = arith.constant dense<0.000000e+00> : vector<1x32xf32>
    %284 = tpu.matmul %281, %283, %cst_106 {dimension_numbers = #tpu.dot_dimension_numbers<[1], [0], [0], [1], [0, 0, 1, 1], [], []>} : vector<1x96xf32>, vector<96x32xf32>, vector<1x32xf32> -> vector<1x32xf32>
    %285 = vector.extract_strided_slice %282 {offsets = [0, 0], sizes = [1, 32], strides = [1, 1]} : vector<1x128xf32> to vector<1x32xf32>
    %286 = arith.addf %284, %285 : vector<1x32xf32>
    %cst_107 = arith.constant 0.000000e+00 : f32
    %287 = vector.broadcast %cst_107 : f32 to vector<1x32xf32>
    %288 = arith.maximumf %286, %287 : vector<1x32xf32>
    %c24_108 = arith.constant 24 : index
    %c96 = arith.constant 96 : index
    %289 = vector.load %arg6[%c24_108, %c96] : memref<96x128xf32, #tpu.memory_space<vmem>>, vector<1x32xf32>
    %290 = arith.mulf %288, %289 : vector<1x32xf32>
    %cst_109 = arith.constant dense<0.000000e+00> : vector<1xf32>
    %291 = vector.multi_reduction <add>, %290, %cst_109 [1] : vector<1x32xf32> to vector<1xf32>
    %292 = vector.shape_cast %291 : vector<1xf32> to vector<1x1xf32>
    %293 = vector.extract_strided_slice %282 {offsets = [0, 32], sizes = [1, 1], strides = [1, 1]} : vector<1x128xf32> to vector<1x1xf32>
    %294 = arith.addf %292, %293 : vector<1x1xf32>
    %cst_110 = arith.constant 0.000000e+00 : f32
    %295 = vector.broadcast %cst_110 : f32 to vector<7x1xf32>
    %296 = tpu.concatenate %294, %295 in 0 : vector<1x1xf32>, vector<7x1xf32> -> vector<8x1xf32>
    %297 = vector.shape_cast %296 : vector<8x1xf32> to vector<8x1xf32>
    %298 = vector.broadcast %297 : vector<8x1xf32> to vector<8x128xf32>
    %c0_111 = arith.constant 0 : index
    %c0_112 = arith.constant 0 : index
    %299 = vector.load %arg7[%c0_111, %c0_112] : memref<8x128xf32, #tpu.memory_space<vmem>>, vector<8x128xf32>
    tpu.vector_store %arg7[%c0_111, %c0_112], %298 {strides = array<i32>} : memref<8x128xf32, #tpu.memory_space<vmem>>, vector<8x128xf32>,
    return
  }
  func.func @transform_0(%arg0: i32) -> (i32, i32, i32) {
    %c0_i32 = arith.constant 0 : i32
    %c0_i32_0 = arith.constant 0 : i32
    %c0_i32_1 = arith.constant 0 : i32
    return %arg0, %c0_i32, %c0_i32_0 : i32, i32, i32
  }
  func.func @transform_1(%arg0: i32) -> (i32, i32, i32) {
    %c0_i32 = arith.constant 0 : i32
    %c0_i32_0 = arith.constant 0 : i32
    %c0_i32_1 = arith.constant 0 : i32
    return %arg0, %c0_i32, %c0_i32_0 : i32, i32, i32
  }
  func.func @transform_2(%arg0: i32) -> (i32, i32) {
    %c0_i32 = arith.constant 0 : i32
    %c0_i32_0 = arith.constant 0 : i32
    return %arg0, %c0_i32 : i32, i32
  }
  func.func @transform_3(%arg0: i32) -> (i32, i32) {
    %c0_i32 = arith.constant 0 : i32
    %c0_i32_0 = arith.constant 0 : i32
    %c0_i32_1 = arith.constant 0 : i32
    return %c0_i32, %c0_i32_0 : i32, i32
  }
  func.func @transform_4(%arg0: i32) -> (i32, i32) {
    %c0_i32 = arith.constant 0 : i32
    %c0_i32_0 = arith.constant 0 : i32
    %c0_i32_1 = arith.constant 0 : i32
    return %c0_i32, %c0_i32_0 : i32, i32
  }
  func.func @transform_5(%arg0: i32) -> (i32, i32) {
    %c0_i32 = arith.constant 0 : i32
    %c0_i32_0 = arith.constant 0 : i32
    %c0_i32_1 = arith.constant 0 : i32
    return %c0_i32, %c0_i32_0 : i32, i32
  }
  func.func @transform_6(%arg0: i32) -> (i32, i32) {
    %c0_i32 = arith.constant 0 : i32
    %c0_i32_0 = arith.constant 0 : i32
    return %arg0, %c0_i32 : i32, i32
  }
}

</mosaic_0001>

<llo_original>
// kernel: tpu_custom_call.1
$region0: #{tpu_custom_call.1}
  #allocation0 [shape = 'u32[]', space=smem, size = 0x4, offset = 0x4, fixed_abs, tag = 'smem constant byte address 0x4 - core index']
  #allocation1 [shape = 'u32[72,128]{1,0:T(1,128)}', space=vmem, size = 0x9000, scoped, tag = 'internal scratch']
  %s0 = inlined_call_operand.hbm [shape: f32[2,8,16], index: 0, kind: input, shape index: {}]
  %s1 = inlined_call_operand.vmem [shape: f32[2,12,8], index: 1, kind: input, shape index: {}]
  %s2 = inlined_call_operand.hbm [shape: f32[16,128], index: 2, kind: input, shape index: {}]
  %s3 = inlined_call_operand.vmem [shape: f32[48,128], index: 3, kind: input, shape index: {}]
  %s4 = inlined_call_operand.hbm [shape: f32[48,128], index: 4, kind: input, shape index: {}]
  %s5 = inlined_call_operand.hbm [shape: f32[96,128], index: 5, kind: input, shape index: {}]
  %s6 = inlined_call_operand.hbm [shape: f32[16,128], index: 6, kind: output, shape index: {}]
  %s7 = sld [smem:[#allocation0]]
  $region73: #{tpu_custom_call.1} parent=0
    _
  %s9 = ssub.s32 1, %s7
  %s10 = scalar_select 0, %s9, %s7
  $region1: #{tpu_custom_call.1} parent=0
    #allocation2 [shape = 'u8[8192]{0}', space=vmem, size = 0x2000, scoped, tag = 'input window, operand 0']
    #allocation3 [shape = 's32[2]{0}', space=sflag, size = 0x8, scoped, tag = 'scoped memory for tpu_custom_call.1']
    #allocation4 [shape = 's32[2]{0}', space=sflag, size = 0x8, scoped, tag = 'scoped memory for tpu_custom_call.1']
    #allocation5 [shape = 'u8[8192]{0}', space=vmem, size = 0x2000, scoped, tag = 'input window, operand 2']
    #allocation6 [shape = 's32[2]{0}', space=sflag, size = 0x8, scoped, tag = 'scoped memory for tpu_custom_call.1']
    #allocation7 [shape = 'u8[24576]{0}', space=vmem, size = 0x6000, scoped, tag = 'input window, operand 4, single buffered']
    #allocation8 [shape = 'u8[49152]{0}', space=vmem, size = 0xc000, scoped, tag = 'input window, operand 5, single buffered']
    #allocation9 [shape = 's32[1]{0}', space=sflag, size = 0x4, scoped, tag = 'scoped memory for tpu_custom_call.1']
    #allocation10 [shape = 'u8[8192]{0}', space=vmem, size = 0x2000, scoped, tag = 'output window, operand 0']
    %11 = vsyncpa [#allocation3], 0
    %s12 = scalar_lea.sflag [#allocation3], 1
    %13 = vsyncpa %s12, 0
    %14 = vsyncpa [#allocation6], 0
    %s15 = scalar_lea.sflag [#allocation6], 1
    %16 = vsyncpa %s15, 0
    %17 = vsyncpa [#allocation9], 0
    %18 = vsyncpa [#allocation4], 0
    %s19 = scalar_lea.sflag [#allocation4], 1
    %20 = vsyncpa %s19, 0
    loop: start=0, step=1, limit=4
    $region2: #{tpu_custom_call.1} parent=1 // loop_pre_header
      _
    $region3: #{tpu_custom_call.1} parent=1 // loop_header
      %s22 = sphi 0, %s26
      %p23 = scmp.ge.s32.totalorder %s22, 4
      %s32 = sphi 0, %s34
      %s35 = sphi 0, %s32
      %s36 = sphi 0, %s35
      %s52 = sphi 0, %s36
      %s58 = sphi 0, %s60
      %s61 = sphi 0, %s58
      %s62 = sphi 0, %s61
      %s78 = sphi 0, %s62
      %s84 = sphi 0, %s86
      %s87 = sphi 0, %s84
      %s88 = sphi 0, %s87
      %s104 = sphi 0, %s88
      %s108 = sphi 0, %s108
      %s110 = sphi 0, %s108
      %s111 = sphi 0, %s110
      %s125 = sphi 0, %s111
      %s129 = sphi 0, %s129
      %s131 = sphi 0, %s129
      %s132 = sphi 0, %s131
      %s146 = sphi 0, %s132
      %s150 = sphi 0, %s150
      %s152 = sphi 0, %s150
      %s153 = sphi 0, %s152
      %s167 = sphi 0, %s153
      %s173 = sphi 0, %s175
      %s176 = sphi 0, %s173
      %s177 = sphi 0, %s176
      %s193 = sphi 0, %s177
    $region4: #{tpu_custom_call.1} parent=1 // loop_header_branch
      %25 = sbr.rel (%p23) target = $region8
    $region5: #{tpu_custom_call.1} parent=1 // loop_body
      %s27 = ssub.s32 %s22, 1
      %s28 = ssub.s32 %s22, 2
      %s29 = sadd.s32 %s22, 1
      %s30 = ssub.s32 %s22, %s29
      %p31 = scmp.eq.s32.totalorder %s30, 0
      %s33 = sadd.s32 %s32, 1
      %s34 = scalar_select %p31, %s32, %s33
      %p37 = pneg %p31
      %p38 = scmp.eq.s32.totalorder %s22, 1
      %p39 = por %p37, %p38
      %p40 = scmp.ne.s32.totalorder %s32, %s35
      %p41 = scmp.eq.s32.totalorder %s22, 0
      %p42 = por %p40, %p41
      %p43 = scmp.ne.s32.totalorder %s32, %s35
      %p44 = scmp.eq.s32.totalorder %s27, 1
      %p45 = por %p43, %p44
      %p46 = scmp.ne.s32.totalorder %s35, %s36
      %p47 = scmp.eq.s32.totalorder %s27, 0
      %p48 = por %p46, %p47
      %p49 = scmp.ne.s32.totalorder %s35, %s36
      %p50 = scmp.eq.s32.totalorder %s28, 1
      %p51 = por %p49, %p50
      %p53 = scmp.ne.s32.totalorder %s36, %s52
      %p54 = scmp.eq.s32.totalorder %s28, 0
      %p55 = por %p53, %p54
      %s56 = ssub.s32 %s22, %s29
      %p57 = scmp.eq.s32.totalorder %s56, 0
      %s59 = sadd.s32 %s58, 1
      %s60 = scalar_select %p57, %s58, %s59
      %p63 = pneg %p57
      %p64 = scmp.eq.s32.totalorder %s22, 1
      %p65 = por %p63, %p64
      %p66 = scmp.ne.s32.totalorder %s58, %s61
      %p67 = scmp.eq.s32.totalorder %s22, 0
      %p68 = por %p66, %p67
      %p69 = scmp.ne.s32.totalorder %s58, %s61
      %p70 = scmp.eq.s32.totalorder %s27, 1
      %p71 = por %p69, %p70
      %p72 = scmp.ne.s32.totalorder %s61, %s62
      %p73 = scmp.eq.s32.totalorder %s27, 0
      %p74 = por %p72, %p73
      %p75 = scmp.ne.s32.totalorder %s61, %s62
      %p76 = scmp.eq.s32.totalorder %s28, 1
      %p77 = por %p75, %p76
      %p79 = scmp.ne.s32.totalorder %s62, %s78
      %p80 = scmp.eq.s32.totalorder %s28, 0
      %p81 = por %p79, %p80
      %s82 = ssub.s32 %s22, %s29
      %p83 = scmp.eq.s32.totalorder %s82, 0
      %s85 = sadd.s32 %s84, 1
      %s86 = scalar_select %p83, %s84, %s85
      %p89 = pneg %p83
      %p90 = scmp.eq.s32.totalorder %s22, 1
      %p91 = por %p89, %p90
      %p92 = scmp.ne.s32.totalorder %s84, %s87
      %p93 = scmp.eq.s32.totalorder %s22, 0
      %p94 = por %p92, %p93
      %p95 = scmp.ne.s32.totalorder %s84, %s87
      %p96 = scmp.eq.s32.totalorder %s27, 1
      %p97 = por %p95, %p96
      %p98 = scmp.ne.s32.totalorder %s87, %s88
      %p99 = scmp.eq.s32.totalorder %s27, 0
      %p100 = por %p98, %p99
      %p101 = scmp.ne.s32.totalorder %s87, %s88
      %p102 = scmp.eq.s32.totalorder %s28, 1
      %p103 = por %p101, %p102
      %p105 = scmp.ne.s32.totalorder %s88, %s104
      %p106 = scmp.eq.s32.totalorder %s28, 0
      %p107 = por %p105, %p106
      %s109 = sadd.s32 %s108, 1
      %p112 = scmp.eq.s32.totalorder %s22, 1
      %p113 = scmp.ne.s32.totalorder %s108, %s110
      %p114 = scmp.eq.s32.totalorder %s22, 0
      %p115 = por %p113, %p114
      %p116 = scmp.ne.s32.totalorder %s108, %s110
      %p117 = scmp.eq.s32.totalorder %s27, 1
      %p118 = por %p116, %p117
      %p119 = scmp.ne.s32.totalorder %s110, %s111
      %p120 = scmp.eq.s32.totalorder %s27, 0
      %p121 = por %p119, %p120
      %p122 = scmp.ne.s32.totalorder %s110, %s111
      %p123 = scmp.eq.s32.totalorder %s28, 1
      %p124 = por %p122, %p123
      %p126 = scmp.ne.s32.totalorder %s111, %s125
      %p127 = scmp.eq.s32.totalorder %s28, 0
      %p128 = por %p126, %p127
      %s130 = sadd.s32 %s129, 1
      %p133 = scmp.eq.s32.totalorder %s22, 1
      %p134 = scmp.ne.s32.totalorder %s129, %s131
      %p135 = scmp.eq.s32.totalorder %s22, 0
      %p136 = por %p134, %p135
      %p137 = scmp.ne.s32.totalorder %s129, %s131
      %p138 = scmp.eq.s32.totalorder %s27, 1
      %p139 = por %p137, %p138
      %p140 = scmp.ne.s32.totalorder %s131, %s132
      %p141 = scmp.eq.s32.totalorder %s27, 0
      %p142 = por %p140, %p141
      %p143 = scmp.ne.s32.totalorder %s131, %s132
      %p144 = scmp.eq.s32.totalorder %s28, 1
      %p145 = por %p143, %p144
      %p147 = scmp.ne.s32.totalorder %s132, %s146
      %p148 = scmp.eq.s32.totalorder %s28, 0
      %p149 = por %p147, %p148
      %s151 = sadd.s32 %s150, 1
      %p154 = scmp.eq.s32.totalorder %s22, 1
      %p155 = scmp.ne.s32.totalorder %s150, %s152
      %p156 = scmp.eq.s32.totalorder %s22, 0
      %p157 = por %p155, %p156
      %p158 = scmp.ne.s32.totalorder %s150, %s152
      %p159 = scmp.eq.s32.totalorder %s27, 1
      %p160 = por %p158, %p159
      %p161 = scmp.ne.s32.totalorder %s152, %s153
      %p162 = scmp.eq.s32.totalorder %s27, 0
      %p163 = por %p161, %p162
      %p164 = scmp.ne.s32.totalorder %s152, %s153
      %p165 = scmp.eq.s32.totalorder %s28, 1
      %p166 = por %p164, %p165
      %p168 = scmp.ne.s32.totalorder %s153, %s167
      %p169 = scmp.eq.s32.totalorder %s28, 0
      %p170 = por %p168, %p169
      %s171 = ssub.s32 %s22, %s29
      %p172 = scmp.eq.s32.totalorder %s171, 0
      %s174 = sadd.s32 %s173, 1
      %s175 = scalar_select %p172, %s173, %s174
      %p178 = pneg %p172
      %p179 = scmp.eq.s32.totalorder %s22, 1
      %p180 = por %p178, %p179
      %p181 = scmp.ne.s32.totalorder %s173, %s176
      %p182 = scmp.eq.s32.totalorder %s22, 0
      %p183 = por %p181, %p182
      %p184 = scmp.ne.s32.totalorder %s173, %s176
      %p185 = scmp.eq.s32.totalorder %s27, 1
      %p186 = por %p184, %p185
      %p187 = scmp.ne.s32.totalorder %s176, %s177
      %p188 = scmp.eq.s32.totalorder %s27, 0
      %p189 = por %p187, %p188
      %p190 = scmp.ne.s32.totalorder %s176, %s177
      %p191 = scmp.eq.s32.totalorder %s28, 1
      %p192 = por %p190, %p191
      %p194 = scmp.ne.s32.totalorder %s177, %s193
      %p195 = scmp.eq.s32.totalorder %s28, 0
      %p196 = por %p194, %p195
      %p197 = scmp.le.s32.totalorder 1, %s22
      %p198 = scmp.lt.s32.totalorder %s22, 3
      %p199 = pnand %p197, %p198
      %p200 = pneg %p199
      // Predicated region
      $region9: #{tpu_custom_call.1} parent=5 // pred_check
        _
      $region10: #{tpu_custom_call.1} parent=5 // pred_check_branch
        %202 = sbr.rel (%p199) target = $region12
      $region11: #{tpu_custom_call.1} parent=5 // pred_region
        %s203 = ssub.s32 %s22, 1
        // Predicated region
        $region13: #{tpu_custom_call.1} parent=11 // pred_check
          %p204 = pneg %p121
        $region14: #{tpu_custom_call.1} parent=11 // pred_check_branch
          %206 = sbr.rel (%p204) target = $region16
        $region15: #{tpu_custom_call.1} parent=11 // pred_region
          _
        $region16: #{tpu_custom_call.1} parent=11 // pred_fallthru
          _
        // Predicated region
        $region17: #{tpu_custom_call.1} parent=11 // pred_check
          %p207 = pneg %p142
        $region18: #{tpu_custom_call.1} parent=11 // pred_check_branch
          %209 = sbr.rel (%p207) target = $region20
        $region19: #{tpu_custom_call.1} parent=11 // pred_region
          %211 = vsyncadd [#allocation6], 0
          %s212 = sshll.u32 %s4, 4
          %s213 = int_to_ptr.hbm [resolvable:$true] %s212
          %s214 = sshll.u32 [#allocation7], 4
          %s215 = int_to_ptr.vmem [resolvable:$true] %s214
          %220 = dma.hbm_to_vmem [thread:$0]  %s213, 768, %s215, [#allocation6], 128, 128, 8
        $region20: #{tpu_custom_call.1} parent=11 // pred_fallthru
          _
        // Predicated region
        $region21: #{tpu_custom_call.1} parent=11 // pred_check
          %p221 = pneg %p163
        $region22: #{tpu_custom_call.1} parent=11 // pred_check_branch
          %223 = sbr.rel (%p221) target = $region24
        $region23: #{tpu_custom_call.1} parent=11 // pred_region
          %225 = vsyncadd [#allocation9], 0
          %s226 = sshll.u32 %s5, 4
          %s227 = int_to_ptr.hbm [resolvable:$true] %s226
          %s228 = sshll.u32 [#allocation8], 4
          %s229 = int_to_ptr.vmem [resolvable:$true] %s228
          %234 = dma.hbm_to_vmem [thread:$0]  %s227, 1536, %s229, [#allocation9], 128, 128, 8
        $region24: #{tpu_custom_call.1} parent=11 // pred_fallthru
          _
      $region12: #{tpu_custom_call.1} parent=5 // pred_fallthru
        _
      %p235 = scmp.lt.s32.totalorder %s22, 2
      // Predicated region
      $region25: #{tpu_custom_call.1} parent=5 // pred_check
        %p236 = pneg %p235
      $region26: #{tpu_custom_call.1} parent=5 // pred_check_branch
        %238 = sbr.rel (%p236) target = $region28
      $region27: #{tpu_custom_call.1} parent=5 // pred_region
        // Predicated region
        $region29: #{tpu_custom_call.1} parent=27 // pred_check
          %p239 = pneg %p42
        $region30: #{tpu_custom_call.1} parent=27 // pred_check_branch
          %241 = sbr.rel (%p239) target = $region32
        $region31: #{tpu_custom_call.1} parent=27 // pred_region
          %s242 = sand.u32 %s32, 1
          %s243 = scalar_lea.sflag [#allocation3], %s242
          %s244 = sand.u32 %s32, 1
          %s245 = smul.addr %s244, 8
          %s246 = scalar_lea.vmem [#allocation2], %s245
          %248 = vsyncadd %s243, 0
          %s249 = smul.addr %s22, 8
          %s250 = scalar_lea.hbm %s0, %s249
          %s252 = sshll.u32 %s250, 4
          %s253 = int_to_ptr.hbm [resolvable:$true] %s252
          %s254 = sshll.u32 %s246, 4
          %s255 = int_to_ptr.vmem [resolvable:$true] %s254
          %257 = dma.hbm_to_vmem [thread:$0]  %s253, 128, %s255, %s243
        $region32: #{tpu_custom_call.1} parent=27 // pred_fallthru
          _
        // Predicated region
        $region33: #{tpu_custom_call.1} parent=27 // pred_check
          %p258 = pneg %p68
        $region34: #{tpu_custom_call.1} parent=27 // pred_check_branch
          %260 = sbr.rel (%p258) target = $region36
        $region35: #{tpu_custom_call.1} parent=27 // pred_region
          %p261 = scmp.lt.s32.totalorder %s22, 1
          %s262 = scalar_select %p261, %s22, 1
          %s263 = smul.addr %s262, 2
          %s264 = smul.addr %s263, 8
          %s265 = scalar_lea.vmem %s1, %s264
        $region36: #{tpu_custom_call.1} parent=27 // pred_fallthru
          _
        // Predicated region
        $region37: #{tpu_custom_call.1} parent=27 // pred_check
          %p266 = pneg %p94
        $region38: #{tpu_custom_call.1} parent=27 // pred_check_branch
          %268 = sbr.rel (%p266) target = $region40
        $region39: #{tpu_custom_call.1} parent=27 // pred_region
          %s269 = sand.u32 %s22, 1
          %s270 = scalar_lea.sflag [#allocation6], %s269
          %s271 = sand.u32 %s84, 1
          %s272 = smul.addr %s271, 8
          %s273 = scalar_lea.vmem [#allocation5], %s272
          %275 = vsyncadd %s270, 0
          %s276 = smul.addr %s22, 8
          %s277 = scalar_lea.hbm %s2, %s276
          %s279 = sshll.u32 %s277, 4
          %s280 = int_to_ptr.hbm [resolvable:$true] %s279
          %s281 = sshll.u32 %s273, 4
          %s282 = int_to_ptr.vmem [resolvable:$true] %s281
          %284 = dma.hbm_to_vmem [thread:$0]  %s280, 128, %s282, %s270
        $region40: #{tpu_custom_call.1} parent=27 // pred_fallthru
          _
      $region28: #{tpu_custom_call.1} parent=5 // pred_fallthru
        _
      %p285 = scmp.le.s32.totalorder 1, %s22
      %p286 = scmp.lt.s32.totalorder %s22, 3
      %p287 = pnand %p285, %p286
      %p288 = pneg %p287
      // Predicated region
      $region41: #{tpu_custom_call.1} parent=5 // pred_check
        _
      $region42: #{tpu_custom_call.1} parent=5 // pred_check_branch
        %290 = sbr.rel (%p287) target = $region44
      $region43: #{tpu_custom_call.1} parent=5 // pred_region
        %s291 = ssub.s32 %s22, 1
        %s292 = sand.u32 %s35, 1
        %s293 = scalar_lea.sflag [#allocation3], %s292
        %s294 = sand.u32 %s35, 1
        %s295 = smul.addr %s294, 8
        %s296 = scalar_lea.vmem [#allocation2], %s295
        // Predicated region
        $region45: #{tpu_custom_call.1} parent=43 // pred_check
          %p297 = pneg %p48
        $region46: #{tpu_custom_call.1} parent=43 // pred_check_branch
          %299 = sbr.rel (%p297) target = $region48
        $region47: #{tpu_custom_call.1} parent=43 // pred_region
          %301 = dma.done %s293, 128
        $region48: #{tpu_custom_call.1} parent=43 // pred_fallthru
          _
        %s302 = sand.u32 %s27, 1
        %s303 = scalar_lea.sflag [#allocation6], %s302
        %s304 = sand.u32 %s87, 1
        %s305 = smul.addr %s304, 8
        %s306 = scalar_lea.vmem [#allocation5], %s305
        // Predicated region
        $region49: #{tpu_custom_call.1} parent=43 // pred_check
          %p307 = pneg %p100
        $region50: #{tpu_custom_call.1} parent=43 // pred_check_branch
          %309 = sbr.rel (%p307) target = $region52
        $region51: #{tpu_custom_call.1} parent=43 // pred_region
          %311 = dma.done %s303, 128
        $region52: #{tpu_custom_call.1} parent=43 // pred_fallthru
          _
        // Predicated region
        $region53: #{tpu_custom_call.1} parent=43 // pred_check
          %p312 = pneg %p142
        $region54: #{tpu_custom_call.1} parent=43 // pred_check_branch
          %314 = sbr.rel (%p312) target = $region56
        $region55: #{tpu_custom_call.1} parent=43 // pred_region
          %316 = dma.done [#allocation6], 768
        $region56: #{tpu_custom_call.1} parent=43 // pred_fallthru
          _
        // Predicated region
        $region57: #{tpu_custom_call.1} parent=43 // pred_check
          %p317 = pneg %p163
        $region58: #{tpu_custom_call.1} parent=43 // pred_check_branch
          %319 = sbr.rel (%p317) target = $region60
        $region59: #{tpu_custom_call.1} parent=43 // pred_region
          %321 = dma.done [#allocation9], 1536
        $region60: #{tpu_custom_call.1} parent=43 // pred_fallthru
          _
        %s322 = sand.u32 %s35, 1
        %s323 = scalar_lea.sflag [#allocation3], %s322
        %s324 = sand.u32 %s35, 1
        %s325 = smul.addr %s324, 8
        %s326 = scalar_lea.vmem [#allocation2], %s325
        %p327 = pneg %p48
        %p328 = pneg %p45
        %p329 = scmp.lt.s32.totalorder %s27, 1
        %s330 = scalar_select %p329, %s27, 1
        %s331 = smul.addr %s330, 2
        %s332 = smul.addr %s331, 8
        %s333 = scalar_lea.vmem %s1, %s332
        %p334 = pneg %p74
        %p335 = pneg %p71
        %s336 = sand.u32 %s27, 1
        %s337 = scalar_lea.sflag [#allocation6], %s336
        %s338 = sand.u32 %s87, 1
        %s339 = smul.addr %s338, 8
        %s340 = scalar_lea.vmem [#allocation5], %s339
        %p341 = pneg %p100
        %p342 = pneg %p97
        %p343 = pneg %p121
        %p344 = pneg %p118
        %p345 = pneg %p142
        %p346 = pneg %p139
        %p347 = pneg %p163
        %p348 = pneg %p160
        %p349 = pneg %p189
        %p350 = pneg %p186
        %s351 = sand.u32 %s176, 1
        %s352 = scalar_lea.sflag [#allocation4], %s351
        %s353 = sand.u32 %s176, 1
        %s354 = smul.addr %s353, 8
        %s355 = scalar_lea.vmem [#allocation10], %s354
        %p356 = scmp.lt.s32.totalorder %s27, 1
        %s357 = scalar_select %p356, %s27, 1
        %s358 = smul.addr %s357, 2
        %s359 = smul.addr %s358, 8
        %s360 = scalar_lea.vmem %s1, %s359
        %v361 = vld [vmem:[%s296] sm:$0xff]
        %vm362 = vcmask 123904
        %v363 = vsel %vm362, %v361, -inf
        %v364 = vrot.slane %v363, 4
        %v365 = vmax.f32 %v363, %v364
        %v366 = vrot.slane %v365, 2
        %v367 = vmax.f32 %v365, %v366
        %v368 = vrot.slane %v367, 1
        %v369 = vmax.f32 %v367, %v368
        %vm370 = vcmask 125954
        %v371 = vsel %vm370, %v361, -inf
        %v372 = vrot.slane %v371, 4
        %v373 = vmax.f32 %v371, %v372
        %v374 = vrot.slane %v373, 2
        %v375 = vmax.f32 %v373, %v374
        %v376 = vrot.slane %v375, 1
        %v377 = vmax.f32 %v375, %v376
        %vm378 = vcmask 128004
        %v379 = vsel %vm378, %v361, -inf
        %v380 = vrot.slane %v379, 4
        %v381 = vmax.f32 %v379, %v380
        %v382 = vrot.slane %v381, 2
        %v383 = vmax.f32 %v381, %v382
        %v384 = vrot.slane %v383, 1
        %v385 = vmax.f32 %v383, %v384
        %vm386 = vcmask 130054
        %v387 = vsel %vm386, %v361, -inf
        %v388 = vrot.slane %v387, 4
        %v389 = vmax.f32 %v387, %v388
        %v390 = vrot.slane %v389, 2
        %v391 = vmax.f32 %v389, %v390
        %v392 = vrot.slane %v391, 1
        %v393 = vmax.f32 %v391, %v392
        %vm394 = vcmask 1040384
        %v395 = vsel %vm394, %v369, %v377
        %vm396 = vcmask 1041408
        %v397 = vsel %vm396, %v395, %v385
        %vm398 = vcmask 1042432
        %v399 = vsel %vm398, %v397, %v393
        %vm400 = vcmask 130048
        %v401 = vsel %vm400, %v361, -inf
        %v402 = vrot.slane %v401, 4
        %v403 = vmax.f32 %v401, %v402
        %v404 = vrot.slane %v403, 2
        %v405 = vmax.f32 %v403, %v404
        %v406 = vrot.slane %v405, 1
        %v407 = vmax.f32 %v405, %v406
        %vm408 = vcmask 1043456
        %v409 = vsel %vm408, %v399, %v407
        %v410 = vld [vmem:[#allocation8] sm:$0xff]
        %v411 = vld [vmem:[#allocation8 + $0x8] sm:$0xff]
        %v412 = vld [vmem:[#allocation8 + $0x18] sm:$0x1]
        %v413 = vperm.slane %v412, 0
        %416 = vrot.lane.b32.xlu0 %v410, 96
        %v417 = vpop.permute.xlu0 %416
        %418 = vrot.lane.b32.xlu0 %v411, 96
        %v419 = vpop.permute.xlu0 %418
        %423 = vrot.lane.b32.xlu0 %v413, 96
        %v424 = vpop.permute.xlu0 %423
        %v427 = vsel %vm400, %v409, 0
        %429 = vmatpush.msra.mxu0 0.0
        %430 = vmatpush.msra.mxu0 0.0
        %431 = vmatpush.msra.mxu0 0.0
        %432 = vmatpush.msra.mxu0 0.0
        %433 = vmatpush.msra.mxu0 0.0
        %434 = vmatpush.msra.mxu0 0.0
        %435 = vmatpush.msra.mxu0 0.0
        %436 = vmatpush.msra.mxu0 0.0
        %437 = vmatpush.msra.mxu0 0.0
        %438 = vmatpush.msra.mxu0 0.0
        %439 = vmatpush.msra.mxu0 0.0
        %440 = vmatpush.msra.mxu0 0.0
        %441 = vmatpush.msra.mxu0 0.0
        %442 = vmatpush.msra.mxu0 0.0
        %443 = vmatpush.msra.mxu0 %v419
        %444 = vmatpush.msra.mxu0 %v417
        %445 = vmatmul.f32.gmra.mxu0 %v427
        %v446 = vpop.f32.mrf.mxu0
        %v447 = vadd.f32 %v424, %v446
        %448 = vdwg.mxu0
        %v449 = vld [vmem:[%s360] sm:$0xff]
        %v450 = vld [vmem:[%s360 + $0x8] sm:$0xf]
        %v451 = vld [vmem:[%s3 + $0x28] sm:$0x1]
        %vm452 = vcmask 64512
        %v453 = vsel %vm452, %v449, 0.0
        %454 = vadd.xlane.f32.xlu0 %v453
        %v455 = vpop.xlane.xlu0 %454
        %vm456 = vcmask 60416
        %v457 = vsel %vm456, %v450, 0.0
        %458 = vadd.xlane.f32.xlu0 %v457
        %v459 = vpop.xlane.xlu0 %458
        %v460 = vrcp.pop 8.0
        %v461 = vmul.f32 8.0, %v460
        %v462 = vsub.f32 1.0, %v461
        %v463 = vmul.f32 %v460, %v462
        %v464 = vadd.f32 %v460, %v463
        %vm465 = vweird.f32 %v460
        %v466 = vsel %vm465, %v460, %v464
        %v467 = vmul.f32 %v455, %v466
        %v468 = vmul.f32 %v459, %v466
        %v469 = vsub.f32 %v449, %v467
        %v470 = vsub.f32 %v450, %v468
        %v471 = vmul.f32 %v469, %v469
        %v472 = vmul.f32 %v470, %v470
        %v473 = vsel %vm452, %v471, 0.0
        %474 = vadd.xlane.f32.xlu0 %v473
        %v475 = vpop.xlane.xlu0 %474
        %v476 = vsel %vm456, %v472, 0.0
        %477 = vadd.xlane.f32.xlu0 %v476
        %v478 = vpop.xlane.xlu0 %477
        %v479 = vmul.f32 %v475, %v466
        %v480 = vmul.f32 %v478, %v466
        %v481 = vadd.f32 %v479, 1e-05
        %v482 = vadd.f32 %v480, 1e-05
        %v483 = vrsqrt.pop %v481
        %v484 = vmul.f32 %v483, %v481
        %v485 = vmul.f32 %v484, %v483
        %v486 = vmul.f32 0.5, %v485
        %v487 = vsub.f32 1.5, %v486
        %v488 = vmul.f32 %v483, %v487
        %vm489 = vweird.f32 %v481
        %vm490 = vweird.f32 %v483
        %vm491 = vmor %vm489, %vm490
        %v492 = vsel %vm491, %v483, %v488
        %v493 = vrsqrt.pop %v482
        %v494 = vmul.f32 %v493, %v482
        %v495 = vmul.f32 %v494, %v493
        %v496 = vmul.f32 0.5, %v495
        %v497 = vsub.f32 1.5, %v496
        %v498 = vmul.f32 %v493, %v497
        %vm499 = vweird.f32 %v482
        %vm500 = vweird.f32 %v493
        %vm501 = vmor %vm499, %vm500
        %v502 = vsel %vm501, %v493, %v498
        %v503 = vmul.f32 %v469, %v492
        %v504 = vmul.f32 %v470, %v502
        %v505 = vperm.slane %v451, 0
        %v506 = vmul.f32 %v503, %v505
        %v507 = vmul.f32 %v504, %v505
        %509 = vrot.lane.b32.xlu0 %v505, 120
        %v510 = vpop.permute.xlu0 %509
        %v512 = vadd.f32 %v506, %v510
        %v513 = vadd.f32 %v507, %v510
        %vm514 = vcmask 257024
        %v515 = vsel %vm514, %v447, 0.0
        %516 = vadd.xlane.f32.xlu0 %v515
        %v517 = vpop.xlane.xlu0 %516
        %v518 = vrcp.pop 32.0
        %v519 = vmul.f32 32.0, %v518
        %v520 = vsub.f32 1.0, %v519
        %v521 = vmul.f32 %v518, %v520
        %v522 = vadd.f32 %v518, %v521
        %vm523 = vweird.f32 %v518
        %v524 = vsel %vm523, %v518, %v522
        %v525 = vmul.f32 %v517, %v524
        %v526 = vsub.f32 %v447, %v525
        %v527 = vmul.f32 %v526, %v526
        %v528 = vsel %vm514, %v527, 0.0
        %529 = vadd.xlane.f32.xlu0 %v528
        %v530 = vpop.xlane.xlu0 %529
        %v531 = vmul.f32 %v530, %v524
        %v532 = vadd.f32 %v531, 1e-05
        %v533 = vrsqrt.pop %v532
        %v534 = vmul.f32 %v533, %v532
        %v535 = vmul.f32 %v534, %v533
        %v536 = vmul.f32 0.5, %v535
        %v537 = vsub.f32 1.5, %v536
        %v538 = vmul.f32 %v533, %v537
        %vm539 = vweird.f32 %v532
        %vm540 = vweird.f32 %v533
        %vm541 = vmor %vm539, %vm540
        %v542 = vsel %vm541, %v533, %v538
        %v543 = vmul.f32 %v526, %v542
        %v544 = vld [vmem:[%s3] sm:$0xff]
        %v546 = vsel %vm452, %v512, 0
        %v549 = vsel %vm452, %v513, 0
        %551 = vmatpush.msra.mxu0 0.0
        %552 = vmatpush.msra.mxu0 0.0
        %553 = vmatpush.msra.mxu0 0.0
        %554 = vmatpush.msra.mxu0 0.0
        %555 = vmatpush.msra.mxu0 0.0
        %556 = vmatpush.msra.mxu0 0.0
        %557 = vmatpush.msra.mxu0 0.0
        %558 = vmatpush.msra.mxu0 0.0
        %559 = vmatpush.msra.mxu0 0.0
        %560 = vmatpush.msra.mxu0 0.0
        %561 = vmatpush.msra.mxu0 0.0
        %562 = vmatpush.msra.mxu0 0.0
        %563 = vmatpush.msra.mxu0 0.0
        %564 = vmatpush.msra.mxu0 0.0
        %565 = vmatpush.msra.mxu0 0.0
        %566 = vmatpush.msra.mxu0 %v544
        %567 = vmatmul.f32.gmra.mxu0 %v546
        %v568 = vpop.f32.mrf.mxu0
        %v569 = vadd.f32 0.0, %v568
        %570 = vmatmul.f32.gmra.mxu0 %v549
        %v571 = vpop.f32.mrf.mxu0
        %v572 = vadd.f32 0.0, %v571
        %573 = vdwg.mxu0
        %v574 = vld [vmem:[%s3 + $0x8] sm:$0xff]
        %v575 = vld [vmem:[%s3 + $0x10] sm:$0xff]
        %v576 = vld [vmem:[%s3 + $0x18] sm:$0xff]
        %v577 = vld [vmem:[%s3 + $0x20] sm:$0xff]
        %578 = vrot.lane.b32.xlu0 %v505, 112
        %v579 = vpop.permute.xlu0 %578
        %vm581 = vcmask 261120
        %v583 = vsel %vm581, %v543, 0
        %585 = vmatpush.msra.mxu0 0.0
        %586 = vmatpush.msra.mxu0 0.0
        %587 = vmatpush.msra.mxu0 0.0
        %588 = vmatpush.msra.mxu0 0.0
        %589 = vmatpush.msra.mxu0 0.0
        %590 = vmatpush.msra.mxu0 0.0
        %591 = vmatpush.msra.mxu0 0.0
        %592 = vmatpush.msra.mxu0 0.0
        %593 = vmatpush.msra.mxu0 0.0
        %594 = vmatpush.msra.mxu0 0.0
        %595 = vmatpush.msra.mxu0 0.0
        %596 = vmatpush.msra.mxu0 0.0
        %597 = vmatpush.msra.mxu0 %v577
        %598 = vmatpush.msra.mxu0 %v576
        %599 = vmatpush.msra.mxu0 %v575
        %600 = vmatpush.msra.mxu0 %v574
        %601 = vmatmul.f32.gmra.mxu0 %v583
        %v602 = vpop.f32.mrf.mxu0
        %v603 = vadd.f32 %v579, %v602
        %604 = vdwg.mxu0
        %v606 = vsel %vm452, %v569, 0
        %v609 = vsel %vm452, %v572, 0
        %v612 = vsel %vm452, %v603, 0
        %614 = vmatpush.xpose.msra.mxu0 0.0
        %615 = vmatpush.xpose.msra.mxu0 0.0
        %616 = vmatpush.xpose.msra.mxu0 0.0
        %617 = vmatpush.xpose.msra.mxu0 0.0
        %618 = vmatpush.xpose.msra.mxu0 0.0
        %619 = vmatpush.xpose.msra.mxu0 0.0
        %620 = vmatpush.xpose.msra.mxu0 0.0
        %621 = vmatpush.xpose.msra.mxu0 0.0
        %622 = vmatpush.xpose.msra.mxu0 0.0
        %623 = vmatpush.xpose.msra.mxu0 0.0
        %624 = vmatpush.xpose.msra.mxu0 0.0
        %625 = vmatpush.xpose.msra.mxu0 0.0
        %626 = vmatpush.xpose.msra.mxu0 0.0
        %627 = vmatpush.xpose.msra.mxu0 0.0
        %628 = vmatpush.xpose.msra.mxu0 0.0
        %629 = vmatpush.xpose.msra.mxu0 %v612
        %630 = vmatmul.f32.gmra.mxu0 %v606
        %v631 = vpop.f32.mrf.mxu0
        %v632 = vadd.f32 0.0, %v631
        %633 = vmatmul.f32.gmra.mxu0 %v609
        %v634 = vpop.f32.mrf.mxu0
        %v635 = vadd.f32 0.0, %v634
        %636 = vdwg.mxu0
        %637 = vrot.lane.b32.xlu0 %v569, 120
        %v638 = vpop.permute.xlu0 %637
        %639 = vrot.lane.b32.xlu0 %v572, 120
        %v640 = vpop.permute.xlu0 %639
        %641 = vrot.lane.b32.xlu0 %v603, 120
        %v642 = vpop.permute.xlu0 %641
        %v643 = vsel %vm452, %v638, 0
        %v645 = vsel %vm452, %v640, 0
        %v647 = vsel %vm452, %v642, 0
        %649 = vmatpush.xpose.msra.mxu0 0.0
        %650 = vmatpush.xpose.msra.mxu0 0.0
        %651 = vmatpush.xpose.msra.mxu0 0.0
        %652 = vmatpush.xpose.msra.mxu0 0.0
        %653 = vmatpush.xpose.msra.mxu0 0.0
        %654 = vmatpush.xpose.msra.mxu0 0.0
        %655 = vmatpush.xpose.msra.mxu0 0.0
        %656 = vmatpush.xpose.msra.mxu0 0.0
        %657 = vmatpush.xpose.msra.mxu0 0.0
        %658 = vmatpush.xpose.msra.mxu0 0.0
        %659 = vmatpush.xpose.msra.mxu0 0.0
        %660 = vmatpush.xpose.msra.mxu0 0.0
        %661 = vmatpush.xpose.msra.mxu0 0.0
        %662 = vmatpush.xpose.msra.mxu0 0.0
        %663 = vmatpush.xpose.msra.mxu0 0.0
        %664 = vmatpush.xpose.msra.mxu0 %v647
        %665 = vmatmul.f32.gmra.mxu0 %v643
        %v666 = vpop.f32.mrf.mxu0
        %v667 = vadd.f32 0.0, %v666
        %668 = vmatmul.f32.gmra.mxu0 %v645
        %v669 = vpop.f32.mrf.mxu0
        %v670 = vadd.f32 0.0, %v669
        %671 = vdwg.mxu0
        %672 = vrot.lane.b32.xlu0 %v569, 112
        %v673 = vpop.permute.xlu0 %672
        %674 = vrot.lane.b32.xlu0 %v572, 112
        %v675 = vpop.permute.xlu0 %674
        %676 = vrot.lane.b32.xlu0 %v603, 112
        %v677 = vpop.permute.xlu0 %676
        %v678 = vsel %vm452, %v673, 0
        %v680 = vsel %vm452, %v675, 0
        %v682 = vsel %vm452, %v677, 0
        %684 = vmatpush.xpose.msra.mxu0 0.0
        %685 = vmatpush.xpose.msra.mxu0 0.0
        %686 = vmatpush.xpose.msra.mxu0 0.0
        %687 = vmatpush.xpose.msra.mxu0 0.0
        %688 = vmatpush.xpose.msra.mxu0 0.0
        %689 = vmatpush.xpose.msra.mxu0 0.0
        %690 = vmatpush.xpose.msra.mxu0 0.0
        %691 = vmatpush.xpose.msra.mxu0 0.0
        %692 = vmatpush.xpose.msra.mxu0 0.0
        %693 = vmatpush.xpose.msra.mxu0 0.0
        %694 = vmatpush.xpose.msra.mxu0 0.0
        %695 = vmatpush.xpose.msra.mxu0 0.0
        %696 = vmatpush.xpose.msra.mxu0 0.0
        %697 = vmatpush.xpose.msra.mxu0 0.0
        %698 = vmatpush.xpose.msra.mxu0 0.0
        %699 = vmatpush.xpose.msra.mxu0 %v682
        %700 = vmatmul.f32.gmra.mxu0 %v678
        %v701 = vpop.f32.mrf.mxu0
        %v702 = vadd.f32 0.0, %v701
        %703 = vmatmul.f32.gmra.mxu0 %v680
        %v704 = vpop.f32.mrf.mxu0
        %v705 = vadd.f32 0.0, %v704
        %706 = vdwg.mxu0
        %707 = vrot.lane.b32.xlu0 %v569, 104
        %v708 = vpop.permute.xlu0 %707
        %709 = vrot.lane.b32.xlu0 %v572, 104
        %v710 = vpop.permute.xlu0 %709
        %711 = vrot.lane.b32.xlu0 %v603, 104
        %v712 = vpop.permute.xlu0 %711
        %v713 = vsel %vm452, %v708, 0
        %v715 = vsel %vm452, %v710, 0
        %v717 = vsel %vm452, %v712, 0
        %719 = vmatpush.xpose.msra.mxu0 0.0
        %720 = vmatpush.xpose.msra.mxu0 0.0
        %721 = vmatpush.xpose.msra.mxu0 0.0
        %722 = vmatpush.xpose.msra.mxu0 0.0
        %723 = vmatpush.xpose.msra.mxu0 0.0
        %724 = vmatpush.xpose.msra.mxu0 0.0
        %725 = vmatpush.xpose.msra.mxu0 0.0
        %726 = vmatpush.xpose.msra.mxu0 0.0
        %727 = vmatpush.xpose.msra.mxu0 0.0
        %728 = vmatpush.xpose.msra.mxu0 0.0
        %729 = vmatpush.xpose.msra.mxu0 0.0
        %730 = vmatpush.xpose.msra.mxu0 0.0
        %731 = vmatpush.xpose.msra.mxu0 0.0
        %732 = vmatpush.xpose.msra.mxu0 0.0
        %733 = vmatpush.xpose.msra.mxu0 0.0
        %734 = vmatpush.xpose.msra.mxu0 %v717
        %735 = vmatmul.f32.gmra.mxu0 %v713
        %v736 = vpop.f32.mrf.mxu0
        %v737 = vadd.f32 0.0, %v736
        %738 = vmatmul.f32.gmra.mxu0 %v715
        %v739 = vpop.f32.mrf.mxu0
        %v740 = vadd.f32 0.0, %v739
        %741 = vdwg.mxu0
        %v742 = vmax.f32 %v632, %v667
        %v743 = vmax.f32 %v635, %v670
        %v744 = vmax.f32 %v742, %v702
        %v745 = vmax.f32 %v743, %v705
        %v746 = vmax.f32 %v744, %v737
        %v747 = vmax.f32 %v745, %v740
        %v748 = vsub.f32 %v632, %v746
        %v749 = vsub.f32 %v635, %v747
        %v750 = vmul.f32 %v748, 1.442695
        %v751 = vpow.pop %v750
        %v752 = vmul.f32 %v749, 1.442695
        %v753 = vpow.pop %v752
        %v754 = vsub.f32 %v667, %v746
        %v755 = vsub.f32 %v670, %v747
        %v756 = vmul.f32 %v754, 1.442695
        %v757 = vpow.pop %v756
        %v758 = vmul.f32 %v755, 1.442695
        %v759 = vpow.pop %v758
        %v760 = vsub.f32 %v702, %v746
        %v761 = vsub.f32 %v705, %v747
        %v762 = vmul.f32 %v760, 1.442695
        %v763 = vpow.pop %v762
        %v764 = vmul.f32 %v761, 1.442695
        %v765 = vpow.pop %v764
        %v766 = vsub.f32 %v737, %v746
        %v767 = vsub.f32 %v740, %v747
        %v768 = vmul.f32 %v766, 1.442695
        %v769 = vpow.pop %v768
        %v770 = vmul.f32 %v767, 1.442695
        %v771 = vpow.pop %v770
        %v772 = vadd.f32 %v751, %v757
        %v773 = vadd.f32 %v753, %v759
        %v774 = vadd.f32 %v772, %v763
        %v775 = vadd.f32 %v773, %v765
        %v776 = vadd.f32 %v774, %v769
        %v777 = vadd.f32 %v775, %v771
        %v778 = vrcp.pop %v776
        %v779 = vmul.f32 %v776, %v778
        %v780 = vsub.f32 1.0, %v779
        %v781 = vmul.f32 %v778, %v780
        %v782 = vadd.f32 %v778, %v781
        %vm783 = vweird.f32 %v776
        %vm784 = vweird.f32 %v778
        %vm785 = vmor %vm783, %vm784
        %v786 = vsel %vm785, %v778, %v782
        %v787 = vand.u32 2147483647, %v776
        %vm788 = vcmp.eq.f32.partialorder %v787, 8.507059e+37
        %v789 = vand.u32 %v776, 2147483648
        %v790 = vor.u32 1.1754944e-38, %v789
        %v791 = vsel %vm788, %v790, %v786
        %v792 = vmul.f32 1.0, %v791
        %v793 = vrcp.pop %v777
        %v794 = vmul.f32 %v777, %v793
        %v795 = vsub.f32 1.0, %v794
        %v796 = vmul.f32 %v793, %v795
        %v797 = vadd.f32 %v793, %v796
        %vm798 = vweird.f32 %v777
        %vm799 = vweird.f32 %v793
        %vm800 = vmor %vm798, %vm799
        %v801 = vsel %vm800, %v793, %v797
        %v802 = vand.u32 2147483647, %v777
        %vm803 = vcmp.eq.f32.partialorder %v802, 8.507059e+37
        %v804 = vand.u32 %v777, 2147483648
        %v805 = vor.u32 1.1754944e-38, %v804
        %v806 = vsel %vm803, %v805, %v801
        %v807 = vmul.f32 1.0, %v806
        %v808 = vmul.f32 %v751, %v792
        %v809 = vmul.f32 %v753, %v807
        %810 = vrot.lane.b32.xlu0 %v603, 96
        %v811 = vpop.permute.xlu0 %810
        %vm812 = vcmask 31744
        %v814 = vsel %vm812, %v808, 0
        %v817 = vsel %vm812, %v809, 0
        %v819 = vsel %vm408, %v811, 0
        %821 = vmatpush.msra.mxu0 0.0
        %822 = vmatpush.msra.mxu0 0.0
        %823 = vmatpush.msra.mxu0 0.0
        %824 = vmatpush.msra.mxu0 0.0
        %825 = vmatpush.msra.mxu0 0.0
        %826 = vmatpush.msra.mxu0 0.0
        %827 = vmatpush.msra.mxu0 0.0
        %828 = vmatpush.msra.mxu0 0.0
        %829 = vmatpush.msra.mxu0 0.0
        %830 = vmatpush.msra.mxu0 0.0
        %831 = vmatpush.msra.mxu0 0.0
        %832 = vmatpush.msra.mxu0 0.0
        %833 = vmatpush.msra.mxu0 0.0
        %834 = vmatpush.msra.mxu0 0.0
        %835 = vmatpush.msra.mxu0 0.0
        %836 = vmatpush.msra.mxu0 %v819
        %837 = vmatmul.f32.gmra.mxu0 %v814
        %v838 = vpop.f32.mrf.mxu0
        %v839 = vadd.f32 0.0, %v838
        %840 = vmatmul.f32.gmra.mxu0 %v817
        %v841 = vpop.f32.mrf.mxu0
        %v842 = vadd.f32 0.0, %v841
        %843 = vdwg.mxu0
        %v844 = vmul.f32 %v757, %v792
        %v845 = vmul.f32 %v759, %v807
        %846 = vrot.lane.b32.xlu0 %v603, 88
        %v847 = vpop.permute.xlu0 %846
        %v849 = vsel %vm812, %v844, 0
        %v852 = vsel %vm812, %v845, 0
        %v854 = vsel %vm408, %v847, 0
        %856 = vmatpush.msra.mxu0 0.0
        %857 = vmatpush.msra.mxu0 0.0
        %858 = vmatpush.msra.mxu0 0.0
        %859 = vmatpush.msra.mxu0 0.0
        %860 = vmatpush.msra.mxu0 0.0
        %861 = vmatpush.msra.mxu0 0.0
        %862 = vmatpush.msra.mxu0 0.0
        %863 = vmatpush.msra.mxu0 0.0
        %864 = vmatpush.msra.mxu0 0.0
        %865 = vmatpush.msra.mxu0 0.0
        %866 = vmatpush.msra.mxu0 0.0
        %867 = vmatpush.msra.mxu0 0.0
        %868 = vmatpush.msra.mxu0 0.0
        %869 = vmatpush.msra.mxu0 0.0
        %870 = vmatpush.msra.mxu0 0.0
        %871 = vmatpush.msra.mxu0 %v854
        %872 = vmatmul.f32.gmra.mxu0 %v849
        %v873 = vpop.f32.mrf.mxu0
        %v874 = vadd.f32 0.0, %v873
        %875 = vmatmul.f32.gmra.mxu0 %v852
        %v876 = vpop.f32.mrf.mxu0
        %v877 = vadd.f32 0.0, %v876
        %878 = vdwg.mxu0
        %v879 = vmul.f32 %v763, %v792
        %v880 = vmul.f32 %v765, %v807
        %881 = vrot.lane.b32.xlu0 %v603, 80
        %v882 = vpop.permute.xlu0 %881
        %v884 = vsel %vm812, %v879, 0
        %v887 = vsel %vm812, %v880, 0
        %v889 = vsel %vm408, %v882, 0
        %891 = vmatpush.msra.mxu0 0.0
        %892 = vmatpush.msra.mxu0 0.0
        %893 = vmatpush.msra.mxu0 0.0
        %894 = vmatpush.msra.mxu0 0.0
        %895 = vmatpush.msra.mxu0 0.0
        %896 = vmatpush.msra.mxu0 0.0
        %897 = vmatpush.msra.mxu0 0.0
        %898 = vmatpush.msra.mxu0 0.0
        %899 = vmatpush.msra.mxu0 0.0
        %900 = vmatpush.msra.mxu0 0.0
        %901 = vmatpush.msra.mxu0 0.0
        %902 = vmatpush.msra.mxu0 0.0
        %903 = vmatpush.msra.mxu0 0.0
        %904 = vmatpush.msra.mxu0 0.0
        %905 = vmatpush.msra.mxu0 0.0
        %906 = vmatpush.msra.mxu0 %v889
        %907 = vmatmul.f32.gmra.mxu0 %v884
        %v908 = vpop.f32.mrf.mxu0
        %v909 = vadd.f32 0.0, %v908
        %910 = vmatmul.f32.gmra.mxu0 %v887
        %v911 = vpop.f32.mrf.mxu0
        %v912 = vadd.f32 0.0, %v911
        %913 = vdwg.mxu0
        %v914 = vmul.f32 %v769, %v792
        %v915 = vmul.f32 %v771, %v807
        %916 = vrot.lane.b32.xlu0 %v603, 72
        %v917 = vpop.permute.xlu0 %916
        %v919 = vsel %vm812, %v914, 0
        %v922 = vsel %vm812, %v915, 0
        %v924 = vsel %vm408, %v917, 0
        %926 = vmatpush.msra.mxu0 0.0
        %927 = vmatpush.msra.mxu0 0.0
        %928 = vmatpush.msra.mxu0 0.0
        %929 = vmatpush.msra.mxu0 0.0
        %930 = vmatpush.msra.mxu0 0.0
        %931 = vmatpush.msra.mxu0 0.0
        %932 = vmatpush.msra.mxu0 0.0
        %933 = vmatpush.msra.mxu0 0.0
        %934 = vmatpush.msra.mxu0 0.0
        %935 = vmatpush.msra.mxu0 0.0
        %936 = vmatpush.msra.mxu0 0.0
        %937 = vmatpush.msra.mxu0 0.0
        %938 = vmatpush.msra.mxu0 0.0
        %939 = vmatpush.msra.mxu0 0.0
        %940 = vmatpush.msra.mxu0 0.0
        %941 = vmatpush.msra.mxu0 %v924
        %942 = vmatmul.f32.gmra.mxu0 %v919
        %v943 = vpop.f32.mrf.mxu0
        %v944 = vadd.f32 0.0, %v943
        %945 = vmatmul.f32.gmra.mxu0 %v922
        %v946 = vpop.f32.mrf.mxu0
        %v947 = vadd.f32 0.0, %v946
        %948 = vdwg.mxu0
        %951 = vrot.lane.b32.xlu0 %v874, 8
        %v952 = vpop.permute.xlu0 %951
        %953 = vrot.lane.b32.xlu0 %v877, 8
        %v954 = vpop.permute.xlu0 %953
        %959 = vrot.lane.b32.xlu0 %v909, 16
        %v960 = vpop.permute.xlu0 %959
        %961 = vrot.lane.b32.xlu0 %v912, 16
        %v962 = vpop.permute.xlu0 %961
        %967 = vrot.lane.b32.xlu0 %v944, 24
        %v968 = vpop.permute.xlu0 %967
        %969 = vrot.lane.b32.xlu0 %v947, 24
        %v970 = vpop.permute.xlu0 %969
        %v973 = vsel %vm452, %v839, %v952
        %v974 = vsel %vm452, %v842, %v954
        %v975 = vsel %vm400, %v973, %v960
        %v976 = vsel %vm400, %v974, %v962
        %vm977 = vcmask 195584
        %v978 = vsel %vm977, %v975, %v968
        %v979 = vsel %vm977, %v976, %v970
        %984 = vrot.lane.b32.xlu0 %v574, 64
        %v985 = vpop.permute.xlu0 %984
        %986 = vrot.lane.b32.xlu0 %v575, 64
        %v987 = vpop.permute.xlu0 %986
        %988 = vrot.lane.b32.xlu0 %v576, 64
        %v989 = vpop.permute.xlu0 %988
        %990 = vrot.lane.b32.xlu0 %v577, 64
        %v991 = vpop.permute.xlu0 %990
        %996 = vrot.lane.b32.xlu0 %v505, 48
        %v997 = vpop.permute.xlu0 %996
        %v1000 = vsel %vm581, %v978, 0
        %v1003 = vsel %vm581, %v979, 0
        %1005 = vmatpush.msra.mxu0 0.0
        %1006 = vmatpush.msra.mxu0 0.0
        %1007 = vmatpush.msra.mxu0 0.0
        %1008 = vmatpush.msra.mxu0 0.0
        %1009 = vmatpush.msra.mxu0 0.0
        %1010 = vmatpush.msra.mxu0 0.0
        %1011 = vmatpush.msra.mxu0 0.0
        %1012 = vmatpush.msra.mxu0 0.0
        %1013 = vmatpush.msra.mxu0 0.0
        %1014 = vmatpush.msra.mxu0 0.0
        %1015 = vmatpush.msra.mxu0 0.0
        %1016 = vmatpush.msra.mxu0 0.0
        %1017 = vmatpush.msra.mxu0 %v991
        %1018 = vmatpush.msra.mxu0 %v989
        %1019 = vmatpush.msra.mxu0 %v987
        %1020 = vmatpush.msra.mxu0 %v985
        %1021 = vmatmul.f32.gmra.mxu0 %v1000
        %v1022 = vpop.f32.mrf.mxu0
        %v1023 = vadd.f32 %v997, %v1022
        %1024 = vmatmul.f32.gmra.mxu0 %v1003
        %v1025 = vpop.f32.mrf.mxu0
        %v1026 = vadd.f32 %v997, %v1025
        %1027 = vdwg.mxu0
        %1030 = vrot.lane.b32.xlu0 %v1023, 24
        %v1031 = vpop.permute.xlu0 %1030
        %1032 = vrot.lane.b32.xlu0 %v1026, 24
        %v1033 = vpop.permute.xlu0 %1032
        %v1036 = vadd.f32 %v569, %v1031
        %v1037 = vadd.f32 %v572, %v1033
        %v1038 = vsub.f32 0.0, %v1036
        %v1039 = vsub.f32 0.0, %v1037
        %v1040 = vmul.f32 %v1038, 1.442695
        %v1041 = vpow.pop %v1040
        %v1042 = vmul.f32 %v1039, 1.442695
        %v1043 = vpow.pop %v1042
        %v1044 = vadd.f32 %v1041, 1.0
        %v1045 = vadd.f32 %v1043, 1.0
        %v1046 = vrcp.pop %v1044
        %v1047 = vmul.f32 %v1044, %v1046
        %v1048 = vsub.f32 1.0, %v1047
        %v1049 = vmul.f32 %v1046, %v1048
        %v1050 = vadd.f32 %v1046, %v1049
        %vm1051 = vweird.f32 %v1044
        %vm1052 = vweird.f32 %v1046
        %vm1053 = vmor %vm1051, %vm1052
        %v1054 = vsel %vm1053, %v1046, %v1050
        %v1055 = vand.u32 2147483647, %v1044
        %vm1056 = vcmp.eq.f32.partialorder %v1055, 8.507059e+37
        %v1057 = vand.u32 %v1044, 2147483648
        %v1058 = vor.u32 1.1754944e-38, %v1057
        %v1059 = vsel %vm1056, %v1058, %v1054
        %v1060 = vmul.f32 1.0, %v1059
        %v1061 = vrcp.pop %v1045
        %v1062 = vmul.f32 %v1045, %v1061
        %v1063 = vsub.f32 1.0, %v1062
        %v1064 = vmul.f32 %v1061, %v1063
        %v1065 = vadd.f32 %v1061, %v1064
        %vm1066 = vweird.f32 %v1045
        %vm1067 = vweird.f32 %v1061
        %vm1068 = vmor %vm1066, %vm1067
        %v1069 = vsel %vm1068, %v1061, %v1065
        %v1070 = vand.u32 2147483647, %v1045
        %vm1071 = vcmp.eq.f32.partialorder %v1070, 8.507059e+37
        %v1072 = vand.u32 %v1045, 2147483648
        %v1073 = vor.u32 1.1754944e-38, %v1072
        %v1074 = vsel %vm1071, %v1073, %v1069
        %v1075 = vmul.f32 1.0, %v1074
        %1076 = vrot.lane.b32.xlu0 %v512, 32
        %v1077 = vpop.permute.xlu0 %1076
        %1078 = vrot.lane.b32.xlu0 %v513, 32
        %v1079 = vpop.permute.xlu0 %1078
        %v1082 = vmul.f32 %v1060, %v1077
        %v1083 = vmul.f32 %v1075, %v1079
        %v1084 = vsub.f32 1.0, %v1060
        %v1085 = vsub.f32 1.0, %v1075
        %1086 = vrot.lane.b32.xlu0 %v1023, 32
        %v1087 = vpop.permute.xlu0 %1086
        %1088 = vrot.lane.b32.xlu0 %v1026, 32
        %v1089 = vpop.permute.xlu0 %1088
        %v1092 = vmul.f32 %v1084, %v1087
        %v1093 = vmul.f32 %v1085, %v1089
        %v1094 = vadd.f32 %v1082, %v1092
        %v1095 = vadd.f32 %v1083, %v1093
        %vm1096 = vcmask 321792
        %v1097 = vsel %vm1096, %v1094, -inf
        %v1098 = vrot.slane %v1097, 4
        %v1099 = vmax.f32 %v1097, %v1098
        %v1100 = vrot.slane %v1099, 2
        %v1101 = vmax.f32 %v1099, %v1100
        %v1102 = vrot.slane %v1101, 1
        %v1103 = vmax.f32 %v1101, %v1102
        %vm1104 = vcmask 324867
        %v1105 = vsel %vm1104, %v1094, -inf
        %v1106 = vrot.slane %v1105, 4
        %v1107 = vmax.f32 %v1105, %v1106
        %v1108 = vrot.slane %v1107, 2
        %v1109 = vmax.f32 %v1107, %v1108
        %v1110 = vrot.slane %v1109, 1
        %v1111 = vmax.f32 %v1109, %v1110
        %vm1112 = vcmask 326918
        %v1113 = vsel %vm1112, %v1094, -inf
        %vm1114 = vcmask 319744
        %v1115 = vsel %vm1114, %v1095, -inf
        %v1116 = vmax.f32 %v1113, %v1115
        %v1117 = vrot.slane %v1116, 4
        %v1118 = vmax.f32 %v1116, %v1117
        %v1119 = vrot.slane %v1118, 2
        %v1120 = vmax.f32 %v1118, %v1119
        %v1121 = vrot.slane %v1120, 1
        %v1122 = vmax.f32 %v1120, %v1121
        %vm1123 = vcmask 322817
        %v1124 = vsel %vm1123, %v1095, -inf
        %v1125 = vrot.slane %v1124, 4
        %v1126 = vmax.f32 %v1124, %v1125
        %v1127 = vrot.slane %v1126, 2
        %v1128 = vmax.f32 %v1126, %v1127
        %v1129 = vrot.slane %v1128, 1
        %v1130 = vmax.f32 %v1128, %v1129
        %v1131 = vsel %vm394, %v1103, %v1111
        %v1132 = vsel %vm396, %v1131, %v1122
        %v1133 = vsel %vm398, %v1132, %v1130
        %v1134 = vld [vmem:[#allocation8 + $0x10] sm:$0xff]
        %1136 = vrot.lane.b32.xlu0 %v1133, 96
        %v1137 = vpop.permute.xlu0 %1136
        %1139 = vrot.lane.b32.xlu0 %v1134, 96
        %v1140 = vpop.permute.xlu0 %1139
        %1142 = vrot.lane.b32.xlu0 %v413, 64
        %v1143 = vpop.permute.xlu0 %1142
        %v1145 = vsel %vm452, %v1137, 0
        %1147 = vmatpush.msra.mxu0 0.0
        %1148 = vmatpush.msra.mxu0 0.0
        %1149 = vmatpush.msra.mxu0 0.0
        %1150 = vmatpush.msra.mxu0 0.0
        %1151 = vmatpush.msra.mxu0 0.0
        %1152 = vmatpush.msra.mxu0 0.0
        %1153 = vmatpush.msra.mxu0 0.0
        %1154 = vmatpush.msra.mxu0 0.0
        %1155 = vmatpush.msra.mxu0 0.0
        %1156 = vmatpush.msra.mxu0 0.0
        %1157 = vmatpush.msra.mxu0 0.0
        %1158 = vmatpush.msra.mxu0 0.0
        %1159 = vmatpush.msra.mxu0 0.0
        %1160 = vmatpush.msra.mxu0 0.0
        %1161 = vmatpush.msra.mxu0 0.0
        %1162 = vmatpush.msra.mxu0 %v1140
        %1163 = vmatmul.f32.gmra.mxu0 %v1145
        %v1164 = vpop.f32.mrf.mxu0
        %v1165 = vadd.f32 %v1143, %v1164
        %1166 = vdwg.mxu0
        %v1167 = vld [vmem:[#allocation7 + $0x28] sm:$0x1]
        %1170 = vrot.lane.b32.xlu0 %v1094, 96
        %v1171 = vpop.permute.xlu0 %1170
        %1172 = vrot.lane.b32.xlu0 %v1095, 96
        %v1173 = vpop.permute.xlu0 %1172
        %v1176 = vsel %vm452, %v1171, 0.0
        %1177 = vadd.xlane.f32.xlu0 %v1176
        %v1178 = vpop.xlane.xlu0 %1177
        %v1179 = vsel %vm456, %v1173, 0.0
        %1180 = vadd.xlane.f32.xlu0 %v1179
        %v1181 = vpop.xlane.xlu0 %1180
        %v1182 = vmul.f32 %v1178, %v466
        %v1183 = vmul.f32 %v1181, %v466
        %v1184 = vsub.f32 %v1094, %v1182
        %v1185 = vsub.f32 %v1095, %v1183
        %v1186 = vmul.f32 %v1184, %v1184
        %v1187 = vmul.f32 %v1185, %v1185
        %1190 = vrot.lane.b32.xlu0 %v1186, 96
        %v1191 = vpop.permute.xlu0 %1190
        %1192 = vrot.lane.b32.xlu0 %v1187, 96
        %v1193 = vpop.permute.xlu0 %1192
        %v1196 = vsel %vm452, %v1191, 0.0
        %1197 = vadd.xlane.f32.xlu0 %v1196
        %v1198 = vpop.xlane.xlu0 %1197
        %v1199 = vsel %vm456, %v1193, 0.0
        %1200 = vadd.xlane.f32.xlu0 %v1199
        %v1201 = vpop.xlane.xlu0 %1200
        %v1202 = vmul.f32 %v1198, %v466
        %v1203 = vmul.f32 %v1201, %v466
        %v1204 = vadd.f32 %v1202, 1e-05
        %v1205 = vadd.f32 %v1203, 1e-05
        %v1206 = vrsqrt.pop %v1204
        %v1207 = vmul.f32 %v1206, %v1204
        %v1208 = vmul.f32 %v1207, %v1206
        %v1209 = vmul.f32 0.5, %v1208
        %v1210 = vsub.f32 1.5, %v1209
        %v1211 = vmul.f32 %v1206, %v1210
        %vm1212 = vweird.f32 %v1204
        %vm1213 = vweird.f32 %v1206
        %vm1214 = vmor %vm1212, %vm1213
        %v1215 = vsel %vm1214, %v1206, %v1211
        %v1216 = vrsqrt.pop %v1205
        %v1217 = vmul.f32 %v1216, %v1205
        %v1218 = vmul.f32 %v1217, %v1216
        %v1219 = vmul.f32 0.5, %v1218
        %v1220 = vsub.f32 1.5, %v1219
        %v1221 = vmul.f32 %v1216, %v1220
        %vm1222 = vweird.f32 %v1205
        %vm1223 = vweird.f32 %v1216
        %vm1224 = vmor %vm1222, %vm1223
        %v1225 = vsel %vm1224, %v1216, %v1221
        %v1226 = vmul.f32 %v1184, %v1215
        %v1227 = vmul.f32 %v1185, %v1225
        %v1228 = vperm.slane %v1167, 0
        %1230 = vrot.lane.b32.xlu0 %v1228, 32
        %v1231 = vpop.permute.xlu0 %1230
        %v1233 = vmul.f32 %v1226, %v1231
        %v1234 = vmul.f32 %v1227, %v1231
        %1235 = vrot.lane.b32.xlu0 %v1228, 24
        %v1236 = vpop.permute.xlu0 %1235
        %v1238 = vadd.f32 %v1233, %v1236
        %v1239 = vadd.f32 %v1234, %v1236
        %v1240 = vsel %vm514, %v1165, 0.0
        %1241 = vadd.xlane.f32.xlu0 %v1240
        %v1242 = vpop.xlane.xlu0 %1241
        %v1243 = vmul.f32 %v1242, %v524
        %v1244 = vsub.f32 %v1165, %v1243
        %v1245 = vmul.f32 %v1244, %v1244
        %v1246 = vsel %vm514, %v1245, 0.0
        %1247 = vadd.xlane.f32.xlu0 %v1246
        %v1248 = vpop.xlane.xlu0 %1247
        %v1249 = vmul.f32 %v1248, %v524
        %v1250 = vadd.f32 %v1249, 1e-05
        %v1251 = vrsqrt.pop %v1250
        %v1252 = vmul.f32 %v1251, %v1250
        %v1253 = vmul.f32 %v1252, %v1251
        %v1254 = vmul.f32 0.5, %v1253
        %v1255 = vsub.f32 1.5, %v1254
        %v1256 = vmul.f32 %v1251, %v1255
        %vm1257 = vweird.f32 %v1250
        %vm1258 = vweird.f32 %v1251
        %vm1259 = vmor %vm1257, %vm1258
        %v1260 = vsel %vm1259, %v1251, %v1256
        %v1261 = vmul.f32 %v1244, %v1260
        %v1262 = vld [vmem:[#allocation7] sm:$0xff]
        %1265 = vrot.lane.b32.xlu0 %v1238, 96
        %v1266 = vpop.permute.xlu0 %1265
        %1267 = vrot.lane.b32.xlu0 %v1239, 96
        %v1268 = vpop.permute.xlu0 %1267
        %v1269 = vsel %vm452, %v1266, 0
        %v1271 = vsel %vm452, %v1268, 0
        %1273 = vmatpush.msra.mxu0 0.0
        %1274 = vmatpush.msra.mxu0 0.0
        %1275 = vmatpush.msra.mxu0 0.0
        %1276 = vmatpush.msra.mxu0 0.0
        %1277 = vmatpush.msra.mxu0 0.0
        %1278 = vmatpush.msra.mxu0 0.0
        %1279 = vmatpush.msra.mxu0 0.0
        %1280 = vmatpush.msra.mxu0 0.0
        %1281 = vmatpush.msra.mxu0 0.0
        %1282 = vmatpush.msra.mxu0 0.0
        %1283 = vmatpush.msra.mxu0 0.0
        %1284 = vmatpush.msra.mxu0 0.0
        %1285 = vmatpush.msra.mxu0 0.0
        %1286 = vmatpush.msra.mxu0 0.0
        %1287 = vmatpush.msra.mxu0 0.0
        %1288 = vmatpush.msra.mxu0 %v1262
        %1289 = vmatmul.f32.gmra.mxu0 %v1269
        %v1290 = vpop.f32.mrf.mxu0
        %v1291 = vadd.f32 0.0, %v1290
        %1292 = vmatmul.f32.gmra.mxu0 %v1271
        %v1293 = vpop.f32.mrf.mxu0
        %v1294 = vadd.f32 0.0, %v1293
        %1295 = vdwg.mxu0
        %v1296 = vld [vmem:[#allocation7 + $0x8] sm:$0xff]
        %v1297 = vld [vmem:[#allocation7 + $0x10] sm:$0xff]
        %v1298 = vld [vmem:[#allocation7 + $0x18] sm:$0xff]
        %v1299 = vld [vmem:[#allocation7 + $0x20] sm:$0xff]
        %1300 = vrot.lane.b32.xlu0 %v1228, 112
        %v1301 = vpop.permute.xlu0 %1300
        %v1304 = vsel %vm581, %v1261, 0
        %1306 = vmatpush.msra.mxu0 0.0
        %1307 = vmatpush.msra.mxu0 0.0
        %1308 = vmatpush.msra.mxu0 0.0
        %1309 = vmatpush.msra.mxu0 0.0
        %1310 = vmatpush.msra.mxu0 0.0
        %1311 = vmatpush.msra.mxu0 0.0
        %1312 = vmatpush.msra.mxu0 0.0
        %1313 = vmatpush.msra.mxu0 0.0
        %1314 = vmatpush.msra.mxu0 0.0
        %1315 = vmatpush.msra.mxu0 0.0
        %1316 = vmatpush.msra.mxu0 0.0
        %1317 = vmatpush.msra.mxu0 0.0
        %1318 = vmatpush.msra.mxu0 %v1299
        %1319 = vmatpush.msra.mxu0 %v1298
        %1320 = vmatpush.msra.mxu0 %v1297
        %1321 = vmatpush.msra.mxu0 %v1296
        %1322 = vmatmul.f32.gmra.mxu0 %v1304
        %v1323 = vpop.f32.mrf.mxu0
        %v1324 = vadd.f32 %v1301, %v1323
        %1325 = vdwg.mxu0
        %v1327 = vsel %vm452, %v1291, 0
        %v1330 = vsel %vm452, %v1294, 0
        %v1333 = vsel %vm452, %v1324, 0
        %1335 = vmatpush.xpose.msra.mxu0 0.0
        %1336 = vmatpush.xpose.msra.mxu0 0.0
        %1337 = vmatpush.xpose.msra.mxu0 0.0
        %1338 = vmatpush.xpose.msra.mxu0 0.0
        %1339 = vmatpush.xpose.msra.mxu0 0.0
        %1340 = vmatpush.xpose.msra.mxu0 0.0
        %1341 = vmatpush.xpose.msra.mxu0 0.0
        %1342 = vmatpush.xpose.msra.mxu0 0.0
        %1343 = vmatpush.xpose.msra.mxu0 0.0
        %1344 = vmatpush.xpose.msra.mxu0 0.0
        %1345 = vmatpush.xpose.msra.mxu0 0.0
        %1346 = vmatpush.xpose.msra.mxu0 0.0
        %1347 = vmatpush.xpose.msra.mxu0 0.0
        %1348 = vmatpush.xpose.msra.mxu0 0.0
        %1349 = vmatpush.xpose.msra.mxu0 0.0
        %1350 = vmatpush.xpose.msra.mxu0 %v1333
        %1351 = vmatmul.f32.gmra.mxu0 %v1327
        %v1352 = vpop.f32.mrf.mxu0
        %v1353 = vadd.f32 0.0, %v1352
        %1354 = vmatmul.f32.gmra.mxu0 %v1330
        %v1355 = vpop.f32.mrf.mxu0
        %v1356 = vadd.f32 0.0, %v1355
        %1357 = vdwg.mxu0
        %1358 = vrot.lane.b32.xlu0 %v1291, 120
        %v1359 = vpop.permute.xlu0 %1358
        %1360 = vrot.lane.b32.xlu0 %v1294, 120
        %v1361 = vpop.permute.xlu0 %1360
        %1362 = vrot.lane.b32.xlu0 %v1324, 120
        %v1363 = vpop.permute.xlu0 %1362
        %v1364 = vsel %vm452, %v1359, 0
        %v1366 = vsel %vm452, %v1361, 0
        %v1368 = vsel %vm452, %v1363, 0
        %1370 = vmatpush.xpose.msra.mxu0 0.0
        %1371 = vmatpush.xpose.msra.mxu0 0.0
        %1372 = vmatpush.xpose.msra.mxu0 0.0
        %1373 = vmatpush.xpose.msra.mxu0 0.0
        %1374 = vmatpush.xpose.msra.mxu0 0.0
        %1375 = vmatpush.xpose.msra.mxu0 0.0
        %1376 = vmatpush.xpose.msra.mxu0 0.0
        %1377 = vmatpush.xpose.msra.mxu0 0.0
        %1378 = vmatpush.xpose.msra.mxu0 0.0
        %1379 = vmatpush.xpose.msra.mxu0 0.0
        %1380 = vmatpush.xpose.msra.mxu0 0.0
        %1381 = vmatpush.xpose.msra.mxu0 0.0
        %1382 = vmatpush.xpose.msra.mxu0 0.0
        %1383 = vmatpush.xpose.msra.mxu0 0.0
        %1384 = vmatpush.xpose.msra.mxu0 0.0
        %1385 = vmatpush.xpose.msra.mxu0 %v1368
        %1386 = vmatmul.f32.gmra.mxu0 %v1364
        %v1387 = vpop.f32.mrf.mxu0
        %v1388 = vadd.f32 0.0, %v1387
        %1389 = vmatmul.f32.gmra.mxu0 %v1366
        %v1390 = vpop.f32.mrf.mxu0
        %v1391 = vadd.f32 0.0, %v1390
        %1392 = vdwg.mxu0
        %1393 = vrot.lane.b32.xlu0 %v1291, 112
        %v1394 = vpop.permute.xlu0 %1393
        %1395 = vrot.lane.b32.xlu0 %v1294, 112
        %v1396 = vpop.permute.xlu0 %1395
        %1397 = vrot.lane.b32.xlu0 %v1324, 112
        %v1398 = vpop.permute.xlu0 %1397
        %v1399 = vsel %vm452, %v1394, 0
        %v1401 = vsel %vm452, %v1396, 0
        %v1403 = vsel %vm452, %v1398, 0
        %1405 = vmatpush.xpose.msra.mxu0 0.0
        %1406 = vmatpush.xpose.msra.mxu0 0.0
        %1407 = vmatpush.xpose.msra.mxu0 0.0
        %1408 = vmatpush.xpose.msra.mxu0 0.0
        %1409 = vmatpush.xpose.msra.mxu0 0.0
        %1410 = vmatpush.xpose.msra.mxu0 0.0
        %1411 = vmatpush.xpose.msra.mxu0 0.0
        %1412 = vmatpush.xpose.msra.mxu0 0.0
        %1413 = vmatpush.xpose.msra.mxu0 0.0
        %1414 = vmatpush.xpose.msra.mxu0 0.0
        %1415 = vmatpush.xpose.msra.mxu0 0.0
        %1416 = vmatpush.xpose.msra.mxu0 0.0
        %1417 = vmatpush.xpose.msra.mxu0 0.0
        %1418 = vmatpush.xpose.msra.mxu0 0.0
        %1419 = vmatpush.xpose.msra.mxu0 0.0
        %1420 = vmatpush.xpose.msra.mxu0 %v1403
        %1421 = vmatmul.f32.gmra.mxu0 %v1399
        %v1422 = vpop.f32.mrf.mxu0
        %v1423 = vadd.f32 0.0, %v1422
        %1424 = vmatmul.f32.gmra.mxu0 %v1401
        %v1425 = vpop.f32.mrf.mxu0
        %v1426 = vadd.f32 0.0, %v1425
        %1427 = vdwg.mxu0
        %1428 = vrot.lane.b32.xlu0 %v1291, 104
        %v1429 = vpop.permute.xlu0 %1428
        %1430 = vrot.lane.b32.xlu0 %v1294, 104
        %v1431 = vpop.permute.xlu0 %1430
        %1432 = vrot.lane.b32.xlu0 %v1324, 104
        %v1433 = vpop.permute.xlu0 %1432
        %v1434 = vsel %vm452, %v1429, 0
        %v1436 = vsel %vm452, %v1431, 0
        %v1438 = vsel %vm452, %v1433, 0
        %1440 = vmatpush.xpose.msra.mxu0 0.0
        %1441 = vmatpush.xpose.msra.mxu0 0.0
        %1442 = vmatpush.xpose.msra.mxu0 0.0
        %1443 = vmatpush.xpose.msra.mxu0 0.0
        %1444 = vmatpush.xpose.msra.mxu0 0.0
        %1445 = vmatpush.xpose.msra.mxu0 0.0
        %1446 = vmatpush.xpose.msra.mxu0 0.0
        %1447 = vmatpush.xpose.msra.mxu0 0.0
        %1448 = vmatpush.xpose.msra.mxu0 0.0
        %1449 = vmatpush.xpose.msra.mxu0 0.0
        %1450 = vmatpush.xpose.msra.mxu0 0.0
        %1451 = vmatpush.xpose.msra.mxu0 0.0
        %1452 = vmatpush.xpose.msra.mxu0 0.0
        %1453 = vmatpush.xpose.msra.mxu0 0.0
        %1454 = vmatpush.xpose.msra.mxu0 0.0
        %1455 = vmatpush.xpose.msra.mxu0 %v1438
        %1456 = vmatmul.f32.gmra.mxu0 %v1434
        %v1457 = vpop.f32.mrf.mxu0
        %v1458 = vadd.f32 0.0, %v1457
        %1459 = vmatmul.f32.gmra.mxu0 %v1436
        %v1460 = vpop.f32.mrf.mxu0
        %v1461 = vadd.f32 0.0, %v1460
        %1462 = vdwg.mxu0
        %v1463 = vmax.f32 %v1353, %v1388
        %v1464 = vmax.f32 %v1356, %v1391
        %v1465 = vmax.f32 %v1463, %v1423
        %v1466 = vmax.f32 %v1464, %v1426
        %v1467 = vmax.f32 %v1465, %v1458
        %v1468 = vmax.f32 %v1466, %v1461
        %v1469 = vsub.f32 %v1353, %v1467
        %v1470 = vsub.f32 %v1356, %v1468
        %v1471 = vmul.f32 %v1469, 1.442695
        %v1472 = vpow.pop %v1471
        %v1473 = vmul.f32 %v1470, 1.442695
        %v1474 = vpow.pop %v1473
        %v1475 = vsub.f32 %v1388, %v1467
        %v1476 = vsub.f32 %v1391, %v1468
        %v1477 = vmul.f32 %v1475, 1.442695
        %v1478 = vpow.pop %v1477
        %v1479 = vmul.f32 %v1476, 1.442695
        %v1480 = vpow.pop %v1479
        %v1481 = vsub.f32 %v1423, %v1467
        %v1482 = vsub.f32 %v1426, %v1468
        %v1483 = vmul.f32 %v1481, 1.442695
        %v1484 = vpow.pop %v1483
        %v1485 = vmul.f32 %v1482, 1.442695
        %v1486 = vpow.pop %v1485
        %v1487 = vsub.f32 %v1458, %v1467
        %v1488 = vsub.f32 %v1461, %v1468
        %v1489 = vmul.f32 %v1487, 1.442695
        %v1490 = vpow.pop %v1489
        %v1491 = vmul.f32 %v1488, 1.442695
        %v1492 = vpow.pop %v1491
        %v1493 = vadd.f32 %v1472, %v1478
        %v1494 = vadd.f32 %v1474, %v1480
        %v1495 = vadd.f32 %v1493, %v1484
        %v1496 = vadd.f32 %v1494, %v1486
        %v1497 = vadd.f32 %v1495, %v1490
        %v1498 = vadd.f32 %v1496, %v1492
        %v1499 = vrcp.pop %v1497
        %v1500 = vmul.f32 %v1497, %v1499
        %v1501 = vsub.f32 1.0, %v1500
        %v1502 = vmul.f32 %v1499, %v1501
        %v1503 = vadd.f32 %v1499, %v1502
        %vm1504 = vweird.f32 %v1497
        %vm1505 = vweird.f32 %v1499
        %vm1506 = vmor %vm1504, %vm1505
        %v1507 = vsel %vm1506, %v1499, %v1503
        %v1508 = vand.u32 2147483647, %v1497
        %vm1509 = vcmp.eq.f32.partialorder %v1508, 8.507059e+37
        %v1510 = vand.u32 %v1497, 2147483648
        %v1511 = vor.u32 1.1754944e-38, %v1510
        %v1512 = vsel %vm1509, %v1511, %v1507
        %v1513 = vmul.f32 1.0, %v1512
        %v1514 = vrcp.pop %v1498
        %v1515 = vmul.f32 %v1498, %v1514
        %v1516 = vsub.f32 1.0, %v1515
        %v1517 = vmul.f32 %v1514, %v1516
        %v1518 = vadd.f32 %v1514, %v1517
        %vm1519 = vweird.f32 %v1498
        %vm1520 = vweird.f32 %v1514
        %vm1521 = vmor %vm1519, %vm1520
        %v1522 = vsel %vm1521, %v1514, %v1518
        %v1523 = vand.u32 2147483647, %v1498
        %vm1524 = vcmp.eq.f32.partialorder %v1523, 8.507059e+37
        %v1525 = vand.u32 %v1498, 2147483648
        %v1526 = vor.u32 1.1754944e-38, %v1525
        %v1527 = vsel %vm1524, %v1526, %v1522
        %v1528 = vmul.f32 1.0, %v1527
        %v1529 = vmul.f32 %v1472, %v1513
        %v1530 = vmul.f32 %v1474, %v1528
        %1531 = vrot.lane.b32.xlu0 %v1324, 96
        %v1532 = vpop.permute.xlu0 %1531
        %v1534 = vsel %vm812, %v1529, 0
        %v1537 = vsel %vm812, %v1530, 0
        %v1539 = vsel %vm408, %v1532, 0
        %1541 = vmatpush.msra.mxu0 0.0
        %1542 = vmatpush.msra.mxu0 0.0
        %1543 = vmatpush.msra.mxu0 0.0
        %1544 = vmatpush.msra.mxu0 0.0
        %1545 = vmatpush.msra.mxu0 0.0
        %1546 = vmatpush.msra.mxu0 0.0
        %1547 = vmatpush.msra.mxu0 0.0
        %1548 = vmatpush.msra.mxu0 0.0
        %1549 = vmatpush.msra.mxu0 0.0
        %1550 = vmatpush.msra.mxu0 0.0
        %1551 = vmatpush.msra.mxu0 0.0
        %1552 = vmatpush.msra.mxu0 0.0
        %1553 = vmatpush.msra.mxu0 0.0
        %1554 = vmatpush.msra.mxu0 0.0
        %1555 = vmatpush.msra.mxu0 0.0
        %1556 = vmatpush.msra.mxu0 %v1539
        %1557 = vmatmul.f32.gmra.mxu0 %v1534
        %v1558 = vpop.f32.mrf.mxu0
        %v1559 = vadd.f32 0.0, %v1558
        %1560 = vmatmul.f32.gmra.mxu0 %v1537
        %v1561 = vpop.f32.mrf.mxu0
        %v1562 = vadd.f32 0.0, %v1561
        %1563 = vdwg.mxu0
        %v1564 = vmul.f32 %v1478, %v1513
        %v1565 = vmul.f32 %v1480, %v1528
        %1566 = vrot.lane.b32.xlu0 %v1324, 88
        %v1567 = vpop.permute.xlu0 %1566
        %v1569 = vsel %vm812, %v1564, 0
        %v1572 = vsel %vm812, %v1565, 0
        %v1574 = vsel %vm408, %v1567, 0
        %1576 = vmatpush.msra.mxu0 0.0
        %1577 = vmatpush.msra.mxu0 0.0
        %1578 = vmatpush.msra.mxu0 0.0
        %1579 = vmatpush.msra.mxu0 0.0
        %1580 = vmatpush.msra.mxu0 0.0
        %1581 = vmatpush.msra.mxu0 0.0
        %1582 = vmatpush.msra.mxu0 0.0
        %1583 = vmatpush.msra.mxu0 0.0
        %1584 = vmatpush.msra.mxu0 0.0
        %1585 = vmatpush.msra.mxu0 0.0
        %1586 = vmatpush.msra.mxu0 0.0
        %1587 = vmatpush.msra.mxu0 0.0
        %1588 = vmatpush.msra.mxu0 0.0
        %1589 = vmatpush.msra.mxu0 0.0
        %1590 = vmatpush.msra.mxu0 0.0
        %1591 = vmatpush.msra.mxu0 %v1574
        %1592 = vmatmul.f32.gmra.mxu0 %v1569
        %v1593 = vpop.f32.mrf.mxu0
        %v1594 = vadd.f32 0.0, %v1593
        %1595 = vmatmul.f32.gmra.mxu0 %v1572
        %v1596 = vpop.f32.mrf.mxu0
        %v1597 = vadd.f32 0.0, %v1596
        %1598 = vdwg.mxu0
        %v1599 = vmul.f32 %v1484, %v1513
        %v1600 = vmul.f32 %v1486, %v1528
        %1601 = vrot.lane.b32.xlu0 %v1324, 80
        %v1602 = vpop.permute.xlu0 %1601
        %v1604 = vsel %vm812, %v1599, 0
        %v1607 = vsel %vm812, %v1600, 0
        %v1609 = vsel %vm408, %v1602, 0
        %1611 = vmatpush.msra.mxu0 0.0
        %1612 = vmatpush.msra.mxu0 0.0
        %1613 = vmatpush.msra.mxu0 0.0
        %1614 = vmatpush.msra.mxu0 0.0
        %1615 = vmatpush.msra.mxu0 0.0
        %1616 = vmatpush.msra.mxu0 0.0
        %1617 = vmatpush.msra.mxu0 0.0
        %1618 = vmatpush.msra.mxu0 0.0
        %1619 = vmatpush.msra.mxu0 0.0
        %1620 = vmatpush.msra.mxu0 0.0
        %1621 = vmatpush.msra.mxu0 0.0
        %1622 = vmatpush.msra.mxu0 0.0
        %1623 = vmatpush.msra.mxu0 0.0
        %1624 = vmatpush.msra.mxu0 0.0
        %1625 = vmatpush.msra.mxu0 0.0
        %1626 = vmatpush.msra.mxu0 %v1609
        %1627 = vmatmul.f32.gmra.mxu0 %v1604
        %v1628 = vpop.f32.mrf.mxu0
        %v1629 = vadd.f32 0.0, %v1628
        %1630 = vmatmul.f32.gmra.mxu0 %v1607
        %v1631 = vpop.f32.mrf.mxu0
        %v1632 = vadd.f32 0.0, %v1631
        %1633 = vdwg.mxu0
        %v1634 = vmul.f32 %v1490, %v1513
        %v1635 = vmul.f32 %v1492, %v1528
        %1636 = vrot.lane.b32.xlu0 %v1324, 72
        %v1637 = vpop.permute.xlu0 %1636
        %v1639 = vsel %vm812, %v1634, 0
        %v1642 = vsel %vm812, %v1635, 0
        %v1644 = vsel %vm408, %v1637, 0
        %1646 = vmatpush.msra.mxu0 0.0
        %1647 = vmatpush.msra.mxu0 0.0
        %1648 = vmatpush.msra.mxu0 0.0
        %1649 = vmatpush.msra.mxu0 0.0
        %1650 = vmatpush.msra.mxu0 0.0
        %1651 = vmatpush.msra.mxu0 0.0
        %1652 = vmatpush.msra.mxu0 0.0
        %1653 = vmatpush.msra.mxu0 0.0
        %1654 = vmatpush.msra.mxu0 0.0
        %1655 = vmatpush.msra.mxu0 0.0
        %1656 = vmatpush.msra.mxu0 0.0
        %1657 = vmatpush.msra.mxu0 0.0
        %1658 = vmatpush.msra.mxu0 0.0
        %1659 = vmatpush.msra.mxu0 0.0
        %1660 = vmatpush.msra.mxu0 0.0
        %1661 = vmatpush.msra.mxu0 %v1644
        %1662 = vmatmul.f32.gmra.mxu0 %v1639
        %v1663 = vpop.f32.mrf.mxu0
        %v1664 = vadd.f32 0.0, %v1663
        %1665 = vmatmul.f32.gmra.mxu0 %v1642
        %v1666 = vpop.f32.mrf.mxu0
        %v1667 = vadd.f32 0.0, %v1666
        %1668 = vdwg.mxu0
        %1671 = vrot.lane.b32.xlu0 %v1594, 8
        %v1672 = vpop.permute.xlu0 %1671
        %1673 = vrot.lane.b32.xlu0 %v1597, 8
        %v1674 = vpop.permute.xlu0 %1673
        %1679 = vrot.lane.b32.xlu0 %v1629, 16
        %v1680 = vpop.permute.xlu0 %1679
        %1681 = vrot.lane.b32.xlu0 %v1632, 16
        %v1682 = vpop.permute.xlu0 %1681
        %1687 = vrot.lane.b32.xlu0 %v1664, 24
        %v1688 = vpop.permute.xlu0 %1687
        %1689 = vrot.lane.b32.xlu0 %v1667, 24
        %v1690 = vpop.permute.xlu0 %1689
        %v1693 = vsel %vm452, %v1559, %v1672
        %v1694 = vsel %vm452, %v1562, %v1674
        %v1695 = vsel %vm400, %v1693, %v1680
        %v1696 = vsel %vm400, %v1694, %v1682
        %v1697 = vsel %vm977, %v1695, %v1688
        %v1698 = vsel %vm977, %v1696, %v1690
        %1703 = vrot.lane.b32.xlu0 %v1296, 64
        %v1704 = vpop.permute.xlu0 %1703
        %1705 = vrot.lane.b32.xlu0 %v1297, 64
        %v1706 = vpop.permute.xlu0 %1705
        %1707 = vrot.lane.b32.xlu0 %v1298, 64
        %v1708 = vpop.permute.xlu0 %1707
        %1709 = vrot.lane.b32.xlu0 %v1299, 64
        %v1710 = vpop.permute.xlu0 %1709
        %1715 = vrot.lane.b32.xlu0 %v1228, 48
        %v1716 = vpop.permute.xlu0 %1715
        %v1719 = vsel %vm581, %v1697, 0
        %v1722 = vsel %vm581, %v1698, 0
        %1724 = vmatpush.msra.mxu0 0.0
        %1725 = vmatpush.msra.mxu0 0.0
        %1726 = vmatpush.msra.mxu0 0.0
        %1727 = vmatpush.msra.mxu0 0.0
        %1728 = vmatpush.msra.mxu0 0.0
        %1729 = vmatpush.msra.mxu0 0.0
        %1730 = vmatpush.msra.mxu0 0.0
        %1731 = vmatpush.msra.mxu0 0.0
        %1732 = vmatpush.msra.mxu0 0.0
        %1733 = vmatpush.msra.mxu0 0.0
        %1734 = vmatpush.msra.mxu0 0.0
        %1735 = vmatpush.msra.mxu0 0.0
        %1736 = vmatpush.msra.mxu0 %v1710
        %1737 = vmatpush.msra.mxu0 %v1708
        %1738 = vmatpush.msra.mxu0 %v1706
        %1739 = vmatpush.msra.mxu0 %v1704
        %1740 = vmatmul.f32.gmra.mxu0 %v1719
        %v1741 = vpop.f32.mrf.mxu0
        %v1742 = vadd.f32 %v1716, %v1741
        %1743 = vmatmul.f32.gmra.mxu0 %v1722
        %v1744 = vpop.f32.mrf.mxu0
        %v1745 = vadd.f32 %v1716, %v1744
        %1746 = vdwg.mxu0
        %1749 = vrot.lane.b32.xlu0 %v1742, 24
        %v1750 = vpop.permute.xlu0 %1749
        %1751 = vrot.lane.b32.xlu0 %v1745, 24
        %v1752 = vpop.permute.xlu0 %1751
        %v1755 = vadd.f32 %v1291, %v1750
        %v1756 = vadd.f32 %v1294, %v1752
        %v1757 = vsub.f32 0.0, %v1755
        %v1758 = vsub.f32 0.0, %v1756
        %v1759 = vmul.f32 %v1757, 1.442695
        %v1760 = vpow.pop %v1759
        %v1761 = vmul.f32 %v1758, 1.442695
        %v1762 = vpow.pop %v1761
        %v1763 = vadd.f32 %v1760, 1.0
        %v1764 = vadd.f32 %v1762, 1.0
        %v1765 = vrcp.pop %v1763
        %v1766 = vmul.f32 %v1763, %v1765
        %v1767 = vsub.f32 1.0, %v1766
        %v1768 = vmul.f32 %v1765, %v1767
        %v1769 = vadd.f32 %v1765, %v1768
        %vm1770 = vweird.f32 %v1763
        %vm1771 = vweird.f32 %v1765
        %vm1772 = vmor %vm1770, %vm1771
        %v1773 = vsel %vm1772, %v1765, %v1769
        %v1774 = vand.u32 2147483647, %v1763
        %vm1775 = vcmp.eq.f32.partialorder %v1774, 8.507059e+37
        %v1776 = vand.u32 %v1763, 2147483648
        %v1777 = vor.u32 1.1754944e-38, %v1776
        %v1778 = vsel %vm1775, %v1777, %v1773
        %v1779 = vmul.f32 1.0, %v1778
        %v1780 = vrcp.pop %v1764
        %v1781 = vmul.f32 %v1764, %v1780
        %v1782 = vsub.f32 1.0, %v1781
        %v1783 = vmul.f32 %v1780, %v1782
        %v1784 = vadd.f32 %v1780, %v1783
        %vm1785 = vweird.f32 %v1764
        %vm1786 = vweird.f32 %v1780
        %vm1787 = vmor %vm1785, %vm1786
        %v1788 = vsel %vm1787, %v1780, %v1784
        %v1789 = vand.u32 2147483647, %v1764
        %vm1790 = vcmp.eq.f32.partialorder %v1789, 8.507059e+37
        %v1791 = vand.u32 %v1764, 2147483648
        %v1792 = vor.u32 1.1754944e-38, %v1791
        %v1793 = vsel %vm1790, %v1792, %v1788
        %v1794 = vmul.f32 1.0, %v1793
        %v1795 = vmul.f32 %v1779, %v1238
        %v1796 = vmul.f32 %v1794, %v1239
        %v1797 = vsub.f32 1.0, %v1779
        %v1798 = vsub.f32 1.0, %v1794
        %1799 = vrot.lane.b32.xlu0 %v1742, 32
        %v1800 = vpop.permute.xlu0 %1799
        %1801 = vrot.lane.b32.xlu0 %v1745, 32
        %v1802 = vpop.permute.xlu0 %1801
        %v1805 = vmul.f32 %v1797, %v1800
        %v1806 = vmul.f32 %v1798, %v1802
        %v1807 = vadd.f32 %v1795, %v1805
        %v1808 = vadd.f32 %v1796, %v1806
        %1811 = vrot.lane.b32.xlu0 %v1807, 96
        %v1812 = vpop.permute.xlu0 %1811
        %1813 = vrot.lane.b32.xlu0 %v1808, 96
        %v1814 = vpop.permute.xlu0 %1813
        %v1815 = vsel %vm452, %v1812, 0
        %v1817 = vsel %vm452, %v1814, 0
        %1819 = vmatpush.msra.mxu0 0.0
        %1820 = vmatpush.msra.mxu0 0.0
        %1821 = vmatpush.msra.mxu0 0.0
        %1822 = vmatpush.msra.mxu0 0.0
        %1823 = vmatpush.msra.mxu0 0.0
        %1824 = vmatpush.msra.mxu0 0.0
        %1825 = vmatpush.msra.mxu0 0.0
        %1826 = vmatpush.msra.mxu0 0.0
        %1827 = vmatpush.msra.mxu0 0.0
        %1828 = vmatpush.msra.mxu0 0.0
        %1829 = vmatpush.msra.mxu0 0.0
        %1830 = vmatpush.msra.mxu0 0.0
        %1831 = vmatpush.msra.mxu0 0.0
        %1832 = vmatpush.msra.mxu0 0.0
        %1833 = vmatpush.msra.mxu0 0.0
        %1834 = vmatpush.msra.mxu0 %v1140
        %1835 = vmatmul.f32.gmra.mxu0 %v1815
        %v1836 = vpop.f32.mrf.mxu0
        %v1837 = vadd.f32 %v1143, %v1836
        %1838 = vmatmul.f32.gmra.mxu0 %v1817
        %v1839 = vpop.f32.mrf.mxu0
        %v1840 = vadd.f32 %v1143, %v1839
        %1841 = vdwg.mxu0
        %v1842 = vsel %vm581, %v1837, -inf
        %v1843 = vsel %vm514, %v1840, -inf
        %v1844 = vmax.f32 %v1842, %v1843
        %v1845 = vrot.slane %v1844, 4
        %v1846 = vmax.f32 %v1844, %v1845
        %v1847 = vrot.slane %v1846, 2
        %v1848 = vmax.f32 %v1846, %v1847
        %v1849 = vrot.slane %v1848, 1
        %v1850 = vmax.f32 %v1848, %v1849
        %v1851 = vmul.f32 %v1850, %v447
        %1853 = vrot.lane.b32.xlu0 %v1850, 32
        %v1854 = vpop.permute.xlu0 %1853
        %1857 = vrot.lane.b32.xlu0 %v1851, 64
        %v1858 = vpop.permute.xlu0 %1857
        %v1860 = vsel %vm581, %v447, %v1854
        %vm1861 = vcmask 523264
        %v1862 = vsel %vm1861, %v1860, %v1858
        %v1863 = vld [vmem:[%s306] sm:$0x1]
        %v1864 = vld [vmem:[#allocation8] sm:$0xff]
        %v1865 = vld [vmem:[#allocation8 + $0x8] sm:$0xff]
        %v1866 = vld [vmem:[#allocation8 + $0x10] sm:$0xff]
        %v1867 = vld [vmem:[#allocation8 + $0x18] sm:$0xff]
        %v1868 = vld [vmem:[#allocation8 + $0x20] sm:$0xff]
        %v1869 = vld [vmem:[#allocation8 + $0x28] sm:$0xff]
        %v1870 = vld [vmem:[#allocation8 + $0x30] sm:$0xff]
        %v1871 = vld [vmem:[#allocation8 + $0x38] sm:$0xff]
        %v1872 = vld [vmem:[#allocation8 + $0x40] sm:$0xff]
        %v1873 = vld [vmem:[#allocation8 + $0x48] sm:$0xff]
        %v1874 = vld [vmem:[#allocation8 + $0x50] sm:$0xff]
        %v1875 = vld [vmem:[#allocation8 + $0x58] sm:$0xff]
        %v1877 = vrot.slane %v1862, 4
        %vm1878 = vcmask 785408
        %v1879 = vsel %vm1878, %v1877, 0
        %1881 = vmatpush.msra.mxu0 0.0
        %1882 = vmatpush.msra.mxu0 0.0
        %1883 = vmatpush.msra.mxu0 0.0
        %1884 = vmatpush.msra.mxu0 0.0
        %1885 = vmatpush.msra.mxu0 %v1875
        %1886 = vmatpush.msra.mxu0 %v1874
        %1887 = vmatpush.msra.mxu0 %v1873
        %1888 = vmatpush.msra.mxu0 %v1872
        %1889 = vmatpush.msra.mxu0 %v1871
        %1890 = vmatpush.msra.mxu0 %v1870
        %1891 = vmatpush.msra.mxu0 %v1869
        %1892 = vmatpush.msra.mxu0 %v1868
        %1893 = vmatpush.msra.mxu0 %v1867
        %1894 = vmatpush.msra.mxu0 %v1866
        %1895 = vmatpush.msra.mxu0 %v1865
        %1896 = vmatpush.msra.mxu0 %v1864
        %1897 = vmatmul.f32.gmra.mxu0 %v1879
        %v1898 = vpop.f32.mrf.mxu0
        %v1899 = vadd.f32 %v1863, %v1898
        %1900 = vdwg.mxu0
        %v1901 = vmax.f32 %v1899, 0.0
        %1903 = vrot.lane.b32.xlu0 %v412, 32
        %v1904 = vpop.permute.xlu0 %1903
        %v1906 = vmul.f32 %v1901, %v1904
        %vm1907 = vcmask 253952
        %v1908 = vsel %vm1907, %v1906, 0.0
        %1909 = vadd.xlane.f32.xlu0 %v1908
        %v1910 = vpop.xlane.xlu0 %1909
        %v1911 = vadd.f32 %v1910, %v1863
        %v1912 = vsel %vm394, %v1911, 0.0
        %1914 = vset.pattern.permute.xlu0 32
        %1915 = vperm.xlu0 %1914, %v1912
        %v1916 = vpop.permute.xlu0 %1915
        %1918 = vst [vmem:[%s355] sm:$0xff] %v1916
        %s1919 = sand.u32 %s176, 1
        %s1920 = scalar_lea.sflag [#allocation4], %s1919
        %s1921 = sand.u32 %s176, 1
        %s1922 = smul.addr %s1921, 8
        %s1923 = scalar_lea.vmem [#allocation10], %s1922
        // Predicated region
        $region61: #{tpu_custom_call.1} parent=43 // pred_check
          %p1924 = pneg %p186
        $region62: #{tpu_custom_call.1} parent=43 // pred_check_branch
          %1926 = sbr.rel (%p1924) target = $region64
        $region63: #{tpu_custom_call.1} parent=43 // pred_region
          %1928 = vsyncadd %s1920, 0
          %s1929 = smul.addr %s27, 8
          %s1930 = scalar_lea.hbm %s6, %s1929
          %s1932 = sshll.u32 %s1923, 4
          %s1933 = int_to_ptr.vmem [resolvable:$true] %s1932
          %s1934 = sshll.u32 %s1930, 4
          %s1935 = int_to_ptr.hbm [resolvable:$true] %s1934
          %1937 = dma.vmem_to_hbm [thread:$0]  %s1933, 128, %s1935, %s1920
        $region64: #{tpu_custom_call.1} parent=43 // pred_fallthru
          _
      $region44: #{tpu_custom_call.1} parent=5 // pred_fallthru
        _
      %p1938 = scmp.le.s32.totalorder 2, %s22
      // Predicated region
      $region65: #{tpu_custom_call.1} parent=5 // pred_check
        %p1939 = pneg %p1938
      $region66: #{tpu_custom_call.1} parent=5 // pred_check_branch
        %1941 = sbr.rel (%p1939) target = $region68
      $region67: #{tpu_custom_call.1} parent=5 // pred_region
        %s1942 = ssub.s32 %s22, 2
        // Predicated region
        $region69: #{tpu_custom_call.1} parent=67 // pred_check
          %p1943 = pneg %p192
        $region70: #{tpu_custom_call.1} parent=67 // pred_check_branch
          %1945 = sbr.rel (%p1943) target = $region72
        $region71: #{tpu_custom_call.1} parent=67 // pred_region
          %s1946 = sand.u32 %s177, 1
          %s1947 = scalar_lea.sflag [#allocation4], %s1946
          %s1948 = sand.u32 %s177, 1
          %s1949 = smul.addr %s1948, 8
          %s1950 = scalar_lea.vmem [#allocation10], %s1949
          %1952 = dma.done %s1947, 128
        $region72: #{tpu_custom_call.1} parent=67 // pred_fallthru
          _
      $region68: #{tpu_custom_call.1} parent=5 // pred_fallthru
        _
    $region6: #{tpu_custom_call.1} parent=1 // loop_footer
      %s26 = sadd.s32 1, %s22
    $region7: #{tpu_custom_call.1} parent=1 // loop_footer_branch
      %21 = sbr.rel target = $region3
    $region8: #{tpu_custom_call.1} parent=1 // loop_exit
      _
    %1953 = vsyncpa [#allocation3], 1
    %s1954 = scalar_lea.sflag [#allocation3], 1
    %1955 = vsyncpa %s1954, 1
    %1956 = vsyncpa [#allocation6], 1
    %s1957 = scalar_lea.sflag [#allocation6], 1
    %1958 = vsyncpa %s1957, 1
    %1959 = vsyncpa [#allocation9], 1
    %1960 = vsyncpa [#allocation4], 1
    %s1961 = scalar_lea.sflag [#allocation4], 1
    %1962 = vsyncpa %s1961, 1

</llo_original>
